<compile_context>
chip_gen: v6e
topology: v6e:2x2x1
jax: 0.10.0
libtpu: 0.0.40
codegen_flags: <defaults>
</compile_context>

<pallas_src>
import jax
import jax.numpy as jnp
from jax.experimental import pallas as pl
from jax.experimental.pallas import tpu as pltpu


# ----------------------------- fused kernel --------------------------------------

def fused_kernel(node_ref, cut_ref, cell_ref,
                 wn_ref, bn_ref, cn_ref,
                 wc_ref, bc_ref, cc_ref,
                 we_ref, be_ref, ce_ref,
                 w1n_ref, w1c_ref, w1e_ref, b1_ref,
                 w2_ref, b2_ref, w3_ref, b3_ref,
                 out_ref):
    """All refs resident in VMEM."""

    def attention_pool(x_ref, w_ref, b_ref, ctx_ref):
        # x: [B, S, F], w: [F, H], b: [1, H], ctx: [1, H]  ->  pooled [B, F]
        x = x_ref[...].astype(jnp.float32)
        B, S, F = x.shape

        # One lane-dense 2-D matmul instead of a batched einsum with M=S rows.
        h = jnp.dot(x.reshape(B * S, F), w_ref[...],
                    preferred_element_type=jnp.float32) + b_ref[...]
        h = jnp.tanh(h)                                   # [B*S, H]  (EUP)
        h3 = h.reshape(B, S, -1)                          # layout-free reshape

        # Scores via VPU multiply + XLU lane reduce (no N=1 MXU matmul,
        # no [B, S, 1] intermediate). scores: [B, S], S on the lane axis.
        scores = jnp.sum(h3 * ctx_ref[...], axis=-1)

        # Numerically-stable softmax over the sequence axis (last axis here).
        m = jnp.max(scores, axis=-1, keepdims=True)       # [B, 1]
        e = jnp.exp(scores - m)                           # [B, S]  (EUP)
        denom = jnp.sum(e, axis=-1, keepdims=True)        # [B, 1]

        # Un-normalized weighted sum over S as a tiny batched matmul
        # (same rank-3 pattern as flash-attention's 'bqk,bkd->bqd').
        pooled = jnp.einsum("bos,bsf->bof", e.reshape(B, 1, S), x,
                            preferred_element_type=jnp.float32).reshape(B, F)

        # Fold normalization in once per batch row: EUP reciprocal + one
        # Newton-Raphson step to recover full f32 accuracy (2 VPU ops on [B,1]).
        r = pl.reciprocal(denom, approx=True)
        r = r * (2.0 - denom * r)
        return pooled * r                                  # [B, F]

    pooled_n = attention_pool(node_ref, wn_ref, bn_ref, cn_ref)
    pooled_c = attention_pool(cut_ref,  wc_ref, bc_ref, cc_ref)
    pooled_e = attention_pool(cell_ref, we_ref, be_ref, ce_ref)

    # First MLP layer with the concat distributed over row-split W1:
    #   concat(pn, pc, pe) @ W1 == pn @ W1[:Fn] + pc @ W1[Fn:Fn+Fc] + pe @ W1[Fn+Fc:]
    # Pooled features stay in vregs; no scratch, no masked partial-lane stores.
    h = (jnp.dot(pooled_n, w1n_ref[...], preferred_element_type=jnp.float32)
         + jnp.dot(pooled_c, w1c_ref[...], preferred_element_type=jnp.float32)
         + jnp.dot(pooled_e, w1e_ref[...], preferred_element_type=jnp.float32)
         + b1_ref[...])
    h = jnp.maximum(h, 0.0)
    h = jnp.dot(h, w2_ref[...], preferred_element_type=jnp.float32) + b2_ref[...]
    h = jnp.maximum(h, 0.0)
    out_ref[...] = (jnp.dot(h, w3_ref[...], preferred_element_type=jnp.float32)
                    + b3_ref[...])


# ----------------------------- wrapper --------------------------------------------

_VMEM = pl.BlockSpec(memory_space=pltpu.MemorySpace.VMEM)


def mlp_with_attention(params, node_features, cut_features, cell_features):
    wn, bn, ctxn = params["node_attn"]
    wc, bc, ctxc = params["cut_attn"]
    we, be, ctxe = params["cell_attn"]
    w1, b1, w2, b2, w3, b3 = params["mlp"]

    B = node_features.shape[0]
    Fn = node_features.shape[-1]
    Fc = cut_features.shape[-1]
    Fe = cell_features.shape[-1]
    out_dim = w3.shape[1]

    # Host-side (trace-time) row-split of W1; keeps the concat out of the kernel.
    w1n = w1[:Fn]
    w1c = w1[Fn:Fn + Fc]
    w1e = w1[Fn + Fc:Fn + Fc + Fe]

    return pl.pallas_call(
        fused_kernel,
        out_shape=jax.ShapeDtypeStruct((B, out_dim), jnp.float32),
        in_specs=[_VMEM] * 20,
        out_specs=_VMEM,
    )(node_features, cut_features, cell_features,
      wn, bn, ctxn.reshape(1, -1),      # context vector as [1, H] for VPU path
      wc, bc, ctxc.reshape(1, -1),
      we, be, ctxe.reshape(1, -1),
      w1n, w1c, w1e, b1, w2, b2, w3, b3)


# ----------------------------- parameter init ------------------------------------

def init_linear(key, fan_in, fan_out, bias=True):
    kw, kb = jax.random.split(key)
    bound = 1.0 / jnp.sqrt(fan_in)
    w = jax.random.uniform(kw, (fan_in, fan_out), jnp.float32, -bound, bound)
    if not bias:
        return (w,)
    b = jax.random.uniform(kb, (1, fan_out), jnp.float32, -bound, bound)
    return w, b


def init_params(key, node_dim, cut_dim, cell_dim, hidden_dim, output_dim):
    keys = jax.random.split(key, 9)
    params = {}
    # three Attention blocks: Linear(in, H) + context_vector Linear(H, 1, bias=False)
    for name, dim, k0, k1 in (("node_attn", node_dim, keys[0], keys[1]),
                              ("cut_attn", cut_dim, keys[2], keys[3]),
                              ("cell_attn", cell_dim, keys[4], keys[5])):
        w, b = init_linear(k0, dim, hidden_dim)
        (ctx,) = init_linear(k1, hidden_dim, 1, bias=False)   # stored [H, 1]
        params[name] = (w, b, ctx)
    # MLP
    d_total = node_dim + cut_dim + cell_dim
    w1, b1 = init_linear(keys[6], d_total, hidden_dim)
    w2, b2 = init_linear(keys[7], hidden_dim, hidden_dim)
    w3, b3 = init_linear(keys[8], hidden_dim, output_dim)
    params["mlp"] = (w1, b1, w2, b2, w3, b3)
    return params


# ----------------------------- pure-JAX reference ---------------------------------

def _ref_attention_pool(x, w, b, ctx):
    h = jnp.tanh(jnp.einsum("bsf,fh->bsh", x, w) + b)
    scores = jnp.einsum("bsh,ho->bso", h, ctx)          # ctx: [H, 1]
    attn = jax.nn.softmax(scores, axis=1)
    return jnp.sum(attn * x, axis=1)


def _ref_forward(params, node, cut, cell):
    n = _ref_attention_pool(node, *params["node_attn"])
    c = _ref_attention_pool(cut, *params["cut_attn"])
    ce = _ref_attention_pool(cell, *params["cell_attn"])
    x = jnp.concatenate([n, c, ce], axis=1)
    w1, b1, w2, b2, w3, b3 = params["mlp"]
    h = jax.nn.relu(x @ w1 + b1)
    h = jax.nn.relu(h @ w2 + b2)
    return h @ w3 + b3


# ----------------------------- main ------------------------------------------------

if __name__ == "__main__":
    B, S = 2, 8
    node_dim, cut_dim, cell_dim = 6, 5, 7
    hidden_dim, output_dim = 32, 4

    key = jax.random.PRNGKey(0)
    kp, kn, kc, kl = jax.random.split(key, 4)

    params = init_params(kp, node_dim, cut_dim, cell_dim, hidden_dim, output_dim)

    node_features = jax.random.normal(kn, (B, S, node_dim), jnp.float32)
    cut_features = jax.random.normal(kc, (B, S, cut_dim), jnp.float32)
    cell_features = jax.random.normal(kl, (B, S, cell_dim), jnp.float32)

    out = mlp_with_attention(params, node_features, cut_features, cell_features)
    out = jax.block_until_ready(out)

    ref = _ref_forward(params, node_features, cut_features, cell_features)
    assert out.shape == (B, output_dim)
    assert jnp.allclose(out, ref, atol=1e-4, rtol=1e-4), "mismatch vs reference"

    print("KERNEL_OK")
</pallas_src>

<mosaic_0001>
module attributes {stable_mosaic.version = 11 : i64} {
  func.func @fused_kernel(%arg0: memref<2x8x6xf32, #tpu.memory_space<vmem>>, %arg1: memref<2x8x5xf32, #tpu.memory_space<vmem>>, %arg2: memref<2x8x7xf32, #tpu.memory_space<vmem>>, %arg3: memref<6x32xf32, #tpu.memory_space<vmem>>, %arg4: memref<1x32xf32, #tpu.memory_space<vmem>>, %arg5: memref<1x32xf32, #tpu.memory_space<vmem>>, %arg6: memref<5x32xf32, #tpu.memory_space<vmem>>, %arg7: memref<1x32xf32, #tpu.memory_space<vmem>>, %arg8: memref<1x32xf32, #tpu.memory_space<vmem>>, %arg9: memref<7x32xf32, #tpu.memory_space<vmem>>, %arg10: memref<1x32xf32, #tpu.memory_space<vmem>>, %arg11: memref<1x32xf32, #tpu.memory_space<vmem>>, %arg12: memref<6x32xf32, #tpu.memory_space<vmem>>, %arg13: memref<5x32xf32, #tpu.memory_space<vmem>>, %arg14: memref<7x32xf32, #tpu.memory_space<vmem>>, %arg15: memref<1x32xf32, #tpu.memory_space<vmem>>, %arg16: memref<32x32xf32, #tpu.memory_space<vmem>>, %arg17: memref<1x32xf32, #tpu.memory_space<vmem>>, %arg18: memref<32x4xf32, #tpu.memory_space<vmem>>, %arg19: memref<1x4xf32, #tpu.memory_space<vmem>>, %arg20: memref<2x4xf32, #tpu.memory_space<vmem>>) attributes {dimension_semantics = [], scalar_prefetch = 0 : i64, scratch_operands = 0 : i64, tpu.core_type = #tpu.core_type<tc>} {
    %c0 = arith.constant 0 : index
    %c0_0 = arith.constant 0 : index
    %c0_1 = arith.constant 0 : index
    %0 = vector.load %arg0[%c0, %c0_0, %c0_1] : memref<2x8x6xf32, #tpu.memory_space<vmem>>, vector<2x8x6xf32>
    %1 = vector.shape_cast %0 : vector<2x8x6xf32> to vector<16x6xf32>
    %c0_2 = arith.constant 0 : index
    %c0_3 = arith.constant 0 : index
    %2 = vector.load %arg3[%c0_2, %c0_3] : memref<6x32xf32, #tpu.memory_space<vmem>>, vector<6x32xf32>
    %cst = arith.constant dense<0.000000e+00> : vector<16x32xf32>
    %3 = tpu.matmul %1, %2, %cst {dimension_numbers = #tpu.dot_dimension_numbers<[1], [0], [0], [1], [0, 0, 1, 1], [], []>} : vector<16x6xf32>, vector<6x32xf32>, vector<16x32xf32> -> vector<16x32xf32>
    %c0_4 = arith.constant 0 : index
    %c0_5 = arith.constant 0 : index
    %4 = vector.load %arg4[%c0_4, %c0_5] : memref<1x32xf32, #tpu.memory_space<vmem>>, vector<1x32xf32>
    %5 = vector.broadcast %4 : vector<1x32xf32> to vector<16x32xf32>
    %6 = arith.addf %3, %5 : vector<16x32xf32>
    %7 = math.tanh %6 : vector<16x32xf32>
    %8 = vector.shape_cast %7 : vector<16x32xf32> to vector<2x8x32xf32>
    %c0_6 = arith.constant 0 : index
    %c0_7 = arith.constant 0 : index
    %9 = vector.load %arg5[%c0_6, %c0_7] : memref<1x32xf32, #tpu.memory_space<vmem>>, vector<1x32xf32>
    %10 = vector.shape_cast %9 : vector<1x32xf32> to vector<1x1x32xf32>
    %11 = vector.broadcast %10 : vector<1x1x32xf32> to vector<2x8x32xf32>
    %12 = arith.mulf %8, %11 : vector<2x8x32xf32>
    %cst_8 = arith.constant dense<0.000000e+00> : vector<2x8xf32>
    %13 = vector.multi_reduction <add>, %12, %cst_8 [2] : vector<2x8x32xf32> to vector<2x8xf32>
    %cst_9 = arith.constant dense<0xFF800000> : vector<2xf32>
    %14 = vector.multi_reduction <maximumf>, %13, %cst_9 [1] : vector<2x8xf32> to vector<2xf32>
    %15 = vector.shape_cast %14 : vector<2xf32> to vector<2x1xf32>
    %16 = vector.broadcast %15 : vector<2x1xf32> to vector<2x8xf32>
    %17 = arith.subf %13, %16 : vector<2x8xf32>
    %18 = math.exp %17 : vector<2x8xf32>
    %cst_10 = arith.constant dense<0.000000e+00> : vector<2xf32>
    %19 = vector.multi_reduction <add>, %18, %cst_10 [1] : vector<2x8xf32> to vector<2xf32>
    %20 = vector.shape_cast %19 : vector<2xf32> to vector<2x1xf32>
    %21 = vector.shape_cast %18 : vector<2x8xf32> to vector<2x1x8xf32>
    "tpu.trace_start"() <{level = 10 : i32, message = "bos,bsf->bof"}> : () -> ()
    %cst_11 = arith.constant dense<0.000000e+00> : vector<2x1x6xf32>
    %22 = tpu.matmul %21, %0, %cst_11 {dimension_numbers = #tpu.dot_dimension_numbers<[2], [1], [1], [2], [0, 0, 0, 1, 1, 2], [0], [0]>} : vector<2x1x8xf32>, vector<2x8x6xf32>, vector<2x1x6xf32> -> vector<2x1x6xf32>
    "tpu.trace_stop"() : () -> ()
    %23 = vector.shape_cast %22 : vector<2x1x6xf32> to vector<2x6xf32>
    %24 = tpu.reciprocal %20 {approx = true} : vector<2x1xf32> -> vector<2x1xf32>
    %25 = arith.mulf %20, %24 : vector<2x1xf32>
    %cst_12 = arith.constant 2.000000e+00 : f32
    %26 = vector.broadcast %cst_12 : f32 to vector<2x1xf32>
    %27 = arith.subf %26, %25 : vector<2x1xf32>
    %28 = arith.mulf %24, %27 : vector<2x1xf32>
    %29 = vector.broadcast %28 : vector<2x1xf32> to vector<2x6xf32>
    %30 = arith.mulf %23, %29 : vector<2x6xf32>
    %c0_13 = arith.constant 0 : index
    %c0_14 = arith.constant 0 : index
    %c0_15 = arith.constant 0 : index
    %31 = vector.load %arg1[%c0_13, %c0_14, %c0_15] : memref<2x8x5xf32, #tpu.memory_space<vmem>>, vector<2x8x5xf32>
    %32 = vector.shape_cast %31 : vector<2x8x5xf32> to vector<16x5xf32>
    %c0_16 = arith.constant 0 : index
    %c0_17 = arith.constant 0 : index
    %33 = vector.load %arg6[%c0_16, %c0_17] : memref<5x32xf32, #tpu.memory_space<vmem>>, vector<5x32xf32>
    %cst_18 = arith.constant dense<0.000000e+00> : vector<16x32xf32>
    %34 = tpu.matmul %32, %33, %cst_18 {dimension_numbers = #tpu.dot_dimension_numbers<[1], [0], [0], [1], [0, 0, 1, 1], [], []>} : vector<16x5xf32>, vector<5x32xf32>, vector<16x32xf32> -> vector<16x32xf32>
    %c0_19 = arith.constant 0 : index
    %c0_20 = arith.constant 0 : index
    %35 = vector.load %arg7[%c0_19, %c0_20] : memref<1x32xf32, #tpu.memory_space<vmem>>, vector<1x32xf32>
    %36 = vector.broadcast %35 : vector<1x32xf32> to vector<16x32xf32>
    %37 = arith.addf %34, %36 : vector<16x32xf32>
    %38 = math.tanh %37 : vector<16x32xf32>
    %39 = vector.shape_cast %38 : vector<16x32xf32> to vector<2x8x32xf32>
    %c0_21 = arith.constant 0 : index
    %c0_22 = arith.constant 0 : index
    %40 = vector.load %arg8[%c0_21, %c0_22] : memref<1x32xf32, #tpu.memory_space<vmem>>, vector<1x32xf32>
    %41 = vector.shape_cast %40 : vector<1x32xf32> to vector<1x1x32xf32>
    %42 = vector.broadcast %41 : vector<1x1x32xf32> to vector<2x8x32xf32>
    %43 = arith.mulf %39, %42 : vector<2x8x32xf32>
    %cst_23 = arith.constant dense<0.000000e+00> : vector<2x8xf32>
    %44 = vector.multi_reduction <add>, %43, %cst_23 [2] : vector<2x8x32xf32> to vector<2x8xf32>
    %cst_24 = arith.constant dense<0xFF800000> : vector<2xf32>
    %45 = vector.multi_reduction <maximumf>, %44, %cst_24 [1] : vector<2x8xf32> to vector<2xf32>
    %46 = vector.shape_cast %45 : vector<2xf32> to vector<2x1xf32>
    %47 = vector.broadcast %46 : vector<2x1xf32> to vector<2x8xf32>
    %48 = arith.subf %44, %47 : vector<2x8xf32>
    %49 = math.exp %48 : vector<2x8xf32>
    %cst_25 = arith.constant dense<0.000000e+00> : vector<2xf32>
    %50 = vector.multi_reduction <add>, %49, %cst_25 [1] : vector<2x8xf32> to vector<2xf32>
    %51 = vector.shape_cast %50 : vector<2xf32> to vector<2x1xf32>
    %52 = vector.shape_cast %49 : vector<2x8xf32> to vector<2x1x8xf32>
    "tpu.trace_start"() <{level = 10 : i32, message = "bos,bsf->bof"}> : () -> ()
    %cst_26 = arith.constant dense<0.000000e+00> : vector<2x1x5xf32>
    %53 = tpu.matmul %52, %31, %cst_26 {dimension_numbers = #tpu.dot_dimension_numbers<[2], [1], [1], [2], [0, 0, 0, 1, 1, 2], [0], [0]>} : vector<2x1x8xf32>, vector<2x8x5xf32>, vector<2x1x5xf32> -> vector<2x1x5xf32>
    "tpu.trace_stop"() : () -> ()
    %54 = vector.shape_cast %53 : vector<2x1x5xf32> to vector<2x5xf32>
    %55 = tpu.reciprocal %51 {approx = true} : vector<2x1xf32> -> vector<2x1xf32>
    %56 = arith.mulf %51, %55 : vector<2x1xf32>
    %cst_27 = arith.constant 2.000000e+00 : f32
    %57 = vector.broadcast %cst_27 : f32 to vector<2x1xf32>
    %58 = arith.subf %57, %56 : vector<2x1xf32>
    %59 = arith.mulf %55, %58 : vector<2x1xf32>
    %60 = vector.broadcast %59 : vector<2x1xf32> to vector<2x5xf32>
    %61 = arith.mulf %54, %60 : vector<2x5xf32>
    %c0_28 = arith.constant 0 : index
    %c0_29 = arith.constant 0 : index
    %c0_30 = arith.constant 0 : index
    %62 = vector.load %arg2[%c0_28, %c0_29, %c0_30] : memref<2x8x7xf32, #tpu.memory_space<vmem>>, vector<2x8x7xf32>
    %63 = vector.shape_cast %62 : vector<2x8x7xf32> to vector<16x7xf32>
    %c0_31 = arith.constant 0 : index
    %c0_32 = arith.constant 0 : index
    %64 = vector.load %arg9[%c0_31, %c0_32] : memref<7x32xf32, #tpu.memory_space<vmem>>, vector<7x32xf32>
    %cst_33 = arith.constant dense<0.000000e+00> : vector<16x32xf32>
    %65 = tpu.matmul %63, %64, %cst_33 {dimension_numbers = #tpu.dot_dimension_numbers<[1], [0], [0], [1], [0, 0, 1, 1], [], []>} : vector<16x7xf32>, vector<7x32xf32>, vector<16x32xf32> -> vector<16x32xf32>
    %c0_34 = arith.constant 0 : index
    %c0_35 = arith.constant 0 : index
    %66 = vector.load %arg10[%c0_34, %c0_35] : memref<1x32xf32, #tpu.memory_space<vmem>>, vector<1x32xf32>
    %67 = vector.broadcast %66 : vector<1x32xf32> to vector<16x32xf32>
    %68 = arith.addf %65, %67 : vector<16x32xf32>
    %69 = math.tanh %68 : vector<16x32xf32>
    %70 = vector.shape_cast %69 : vector<16x32xf32> to vector<2x8x32xf32>
    %c0_36 = arith.constant 0 : index
    %c0_37 = arith.constant 0 : index
    %71 = vector.load %arg11[%c0_36, %c0_37] : memref<1x32xf32, #tpu.memory_space<vmem>>, vector<1x32xf32>
    %72 = vector.shape_cast %71 : vector<1x32xf32> to vector<1x1x32xf32>
    %73 = vector.broadcast %72 : vector<1x1x32xf32> to vector<2x8x32xf32>
    %74 = arith.mulf %70, %73 : vector<2x8x32xf32>
    %cst_38 = arith.constant dense<0.000000e+00> : vector<2x8xf32>
    %75 = vector.multi_reduction <add>, %74, %cst_38 [2] : vector<2x8x32xf32> to vector<2x8xf32>
    %cst_39 = arith.constant dense<0xFF800000> : vector<2xf32>
    %76 = vector.multi_reduction <maximumf>, %75, %cst_39 [1] : vector<2x8xf32> to vector<2xf32>
    %77 = vector.shape_cast %76 : vector<2xf32> to vector<2x1xf32>
    %78 = vector.broadcast %77 : vector<2x1xf32> to vector<2x8xf32>
    %79 = arith.subf %75, %78 : vector<2x8xf32>
    %80 = math.exp %79 : vector<2x8xf32>
    %cst_40 = arith.constant dense<0.000000e+00> : vector<2xf32>
    %81 = vector.multi_reduction <add>, %80, %cst_40 [1] : vector<2x8xf32> to vector<2xf32>
    %82 = vector.shape_cast %81 : vector<2xf32> to vector<2x1xf32>
    %83 = vector.shape_cast %80 : vector<2x8xf32> to vector<2x1x8xf32>
    "tpu.trace_start"() <{level = 10 : i32, message = "bos,bsf->bof"}> : () -> ()
    %cst_41 = arith.constant dense<0.000000e+00> : vector<2x1x7xf32>
    %84 = tpu.matmul %83, %62, %cst_41 {dimension_numbers = #tpu.dot_dimension_numbers<[2], [1], [1], [2], [0, 0, 0, 1, 1, 2], [0], [0]>} : vector<2x1x8xf32>, vector<2x8x7xf32>, vector<2x1x7xf32> -> vector<2x1x7xf32>
    "tpu.trace_stop"() : () -> ()
    %85 = vector.shape_cast %84 : vector<2x1x7xf32> to vector<2x7xf32>
    %86 = tpu.reciprocal %82 {approx = true} : vector<2x1xf32> -> vector<2x1xf32>
    %87 = arith.mulf %82, %86 : vector<2x1xf32>
    %cst_42 = arith.constant 2.000000e+00 : f32
    %88 = vector.broadcast %cst_42 : f32 to vector<2x1xf32>
    %89 = arith.subf %88, %87 : vector<2x1xf32>
    %90 = arith.mulf %86, %89 : vector<2x1xf32>
    %91 = vector.broadcast %90 : vector<2x1xf32> to vector<2x7xf32>
    %92 = arith.mulf %85, %91 : vector<2x7xf32>
    %c0_43 = arith.constant 0 : index
    %c0_44 = arith.constant 0 : index
    %93 = vector.load %arg12[%c0_43, %c0_44] : memref<6x32xf32, #tpu.memory_space<vmem>>, vector<6x32xf32>
    %cst_45 = arith.constant dense<0.000000e+00> : vector<2x32xf32>
    %94 = tpu.matmul %30, %93, %cst_45 {dimension_numbers = #tpu.dot_dimension_numbers<[1], [0], [0], [1], [0, 0, 1, 1], [], []>} : vector<2x6xf32>, vector<6x32xf32>, vector<2x32xf32> -> vector<2x32xf32>
    %c0_46 = arith.constant 0 : index
    %c0_47 = arith.constant 0 : index
    %95 = vector.load %arg13[%c0_46, %c0_47] : memref<5x32xf32, #tpu.memory_space<vmem>>, vector<5x32xf32>
    %cst_48 = arith.constant dense<0.000000e+00> : vector<2x32xf32>
    %96 = tpu.matmul %61, %95, %cst_48 {dimension_numbers = #tpu.dot_dimension_numbers<[1], [0], [0], [1], [0, 0, 1, 1], [], []>} : vector<2x5xf32>, vector<5x32xf32>, vector<2x32xf32> -> vector<2x32xf32>
    %97 = arith.addf %94, %96 : vector<2x32xf32>
    %c0_49 = arith.constant 0 : index
    %c0_50 = arith.constant 0 : index
    %98 = vector.load %arg14[%c0_49, %c0_50] : memref<7x32xf32, #tpu.memory_space<vmem>>, vector<7x32xf32>
    %cst_51 = arith.constant dense<0.000000e+00> : vector<2x32xf32>
    %99 = tpu.matmul %92, %98, %cst_51 {dimension_numbers = #tpu.dot_dimension_numbers<[1], [0], [0], [1], [0, 0, 1, 1], [], []>} : vector<2x7xf32>, vector<7x32xf32>, vector<2x32xf32> -> vector<2x32xf32>
    %100 = arith.addf %97, %99 : vector<2x32xf32>
    %c0_52 = arith.constant 0 : index
    %c0_53 = arith.constant 0 : index
    %101 = vector.load %arg15[%c0_52, %c0_53] : memref<1x32xf32, #tpu.memory_space<vmem>>, vector<1x32xf32>
    %102 = vector.broadcast %101 : vector<1x32xf32> to vector<2x32xf32>
    %103 = arith.addf %100, %102 : vector<2x32xf32>
    %cst_54 = arith.constant 0.000000e+00 : f32
    %104 = vector.broadcast %cst_54 : f32 to vector<2x32xf32>
    %105 = arith.maximumf %103, %104 : vector<2x32xf32>
    %c0_55 = arith.constant 0 : index
    %c0_56 = arith.constant 0 : index
    %106 = vector.load %arg16[%c0_55, %c0_56] : memref<32x32xf32, #tpu.memory_space<vmem>>, vector<32x32xf32>
    %cst_57 = arith.constant dense<0.000000e+00> : vector<2x32xf32>
    %107 = tpu.matmul %105, %106, %cst_57 {dimension_numbers = #tpu.dot_dimension_numbers<[1], [0], [0], [1], [0, 0, 1, 1], [], []>} : vector<2x32xf32>, vector<32x32xf32>, vector<2x32xf32> -> vector<2x32xf32>
    %c0_58 = arith.constant 0 : index
    %c0_59 = arith.constant 0 : index
    %108 = vector.load %arg17[%c0_58, %c0_59] : memref<1x32xf32, #tpu.memory_space<vmem>>, vector<1x32xf32>
    %109 = vector.broadcast %108 : vector<1x32xf32> to vector<2x32xf32>
    %110 = arith.addf %107, %109 : vector<2x32xf32>
    %cst_60 = arith.constant 0.000000e+00 : f32
    %111 = vector.broadcast %cst_60 : f32 to vector<2x32xf32>
    %112 = arith.maximumf %110, %111 : vector<2x32xf32>
    %c0_61 = arith.constant 0 : index
    %c0_62 = arith.constant 0 : index
    %113 = vector.load %arg18[%c0_61, %c0_62] : memref<32x4xf32, #tpu.memory_space<vmem>>, vector<32x4xf32>
    %cst_63 = arith.constant dense<0.000000e+00> : vector<2x4xf32>
    %114 = tpu.matmul %112, %113, %cst_63 {dimension_numbers = #tpu.dot_dimension_numbers<[1], [0], [0], [1], [0, 0, 1, 1], [], []>} : vector<2x32xf32>, vector<32x4xf32>, vector<2x4xf32> -> vector<2x4xf32>
    %c0_64 = arith.constant 0 : index
    %c0_65 = arith.constant 0 : index
    %115 = vector.load %arg19[%c0_64, %c0_65] : memref<1x4xf32, #tpu.memory_space<vmem>>, vector<1x4xf32>
    %116 = vector.broadcast %115 : vector<1x4xf32> to vector<2x4xf32>
    %117 = arith.addf %114, %116 : vector<2x4xf32>
    %c0_66 = arith.constant 0 : index
    %c0_67 = arith.constant 0 : index
    %118 = vector.load %arg20[%c0_66, %c0_67] : memref<2x4xf32, #tpu.memory_space<vmem>>, vector<2x4xf32>
    tpu.vector_store %arg20[%c0_66, %c0_67], %117 {strides = array<i32>} : memref<2x4xf32, #tpu.memory_space<vmem>>, vector<2x4xf32>,
    return
  }
}

</mosaic_0001>

<llo_original>
// kernel: tpu_custom_call.1
$region0: #{tpu_custom_call.1}
  #allocation0 [shape = 'u32[]', space=smem, size = 0x4, offset = 0x4, fixed_abs, tag = 'smem constant byte address 0x4 - core index']
  #allocation1 [shape = 'u32[144,128]{1,0:T(1,128)}', space=vmem, size = 0x12000, scoped, tag = 'internal scratch']
  %s0 = inlined_call_operand.vmem [shape: f32[2,8,6], index: 0, kind: input, shape index: {}]
  %s1 = inlined_call_operand.vmem [shape: f32[2,8,5], index: 1, kind: input, shape index: {}]
  %s2 = inlined_call_operand.vmem [shape: f32[2,8,7], index: 2, kind: input, shape index: {}]
  %s3 = inlined_call_operand.vmem [shape: f32[6,32], index: 3, kind: input, shape index: {}]
  %s4 = inlined_call_operand.vmem [shape: f32[1,32], index: 4, kind: input, shape index: {}]
  %s5 = inlined_call_operand.vmem [shape: f32[1,32], index: 5, kind: input, shape index: {}]
  %s6 = inlined_call_operand.vmem [shape: f32[5,32], index: 6, kind: input, shape index: {}]
  %s7 = inlined_call_operand.vmem [shape: f32[1,32], index: 7, kind: input, shape index: {}]
  %s8 = inlined_call_operand.vmem [shape: f32[1,32], index: 8, kind: input, shape index: {}]
  %s9 = inlined_call_operand.vmem [shape: f32[7,32], index: 9, kind: input, shape index: {}]
  %s10 = inlined_call_operand.vmem [shape: f32[1,32], index: 10, kind: input, shape index: {}]
  %s11 = inlined_call_operand.vmem [shape: f32[1,32], index: 11, kind: input, shape index: {}]
  %s12 = inlined_call_operand.vmem [shape: f32[6,32], index: 12, kind: input, shape index: {}]
  %s13 = inlined_call_operand.vmem [shape: f32[5,32], index: 13, kind: input, shape index: {}]
  %s14 = inlined_call_operand.vmem [shape: f32[7,32], index: 14, kind: input, shape index: {}]
  %s15 = inlined_call_operand.vmem [shape: f32[1,32], index: 15, kind: input, shape index: {}]
  %s16 = inlined_call_operand.vmem [shape: f32[32,32], index: 16, kind: input, shape index: {}]
  %s17 = inlined_call_operand.vmem [shape: f32[1,32], index: 17, kind: input, shape index: {}]
  %s18 = inlined_call_operand.vmem [shape: f32[32,4], index: 18, kind: input, shape index: {}]
  %s19 = inlined_call_operand.vmem [shape: f32[1,4], index: 19, kind: input, shape index: {}]
  %s20 = inlined_call_operand.hbm [shape: f32[2,4], index: 20, kind: output, shape index: {}]
  %s21 = sld [smem:[#allocation0]]
  $region90: #{tpu_custom_call.1} parent=0
    _
  %s23 = ssub.s32 1, %s21
  %s24 = scalar_select 0, %s23, %s21
  $region1: #{tpu_custom_call.1} parent=0
    #allocation2 [shape = 'u8[1024]{0}', space=vmem, size = 0x400, scoped, tag = 'output window, operand 0, single buffered']
    #allocation3 [shape = 's32[1]{0}', space=sflag, size = 0x4, scoped, tag = 'scoped memory for tpu_custom_call.1']
    %25 = vsyncpa [#allocation3], 0
    // Predicated region
    $region2: #{tpu_custom_call.1} parent=1 // pred_check
      _
    $region3: #{tpu_custom_call.1} parent=1 // pred_check_branch
      %27 = sbr.rel (0) target = $region5
    $region4: #{tpu_custom_call.1} parent=1 // pred_region
      _
    $region5: #{tpu_custom_call.1} parent=1 // pred_fallthru
      _
    // Predicated region
    $region6: #{tpu_custom_call.1} parent=1 // pred_check
      _
    $region7: #{tpu_custom_call.1} parent=1 // pred_check_branch
      %29 = sbr.rel (0) target = $region9
    $region8: #{tpu_custom_call.1} parent=1 // pred_region
      _
    $region9: #{tpu_custom_call.1} parent=1 // pred_fallthru
      _
    // Predicated region
    $region10: #{tpu_custom_call.1} parent=1 // pred_check
      _
    $region11: #{tpu_custom_call.1} parent=1 // pred_check_branch
      %31 = sbr.rel (0) target = $region13
    $region12: #{tpu_custom_call.1} parent=1 // pred_region
      _
    $region13: #{tpu_custom_call.1} parent=1 // pred_fallthru
      _
    // Predicated region
    $region14: #{tpu_custom_call.1} parent=1 // pred_check
      _
    $region15: #{tpu_custom_call.1} parent=1 // pred_check_branch
      %33 = sbr.rel (0) target = $region17
    $region16: #{tpu_custom_call.1} parent=1 // pred_region
      _
    $region17: #{tpu_custom_call.1} parent=1 // pred_fallthru
      _
    // Predicated region
    $region18: #{tpu_custom_call.1} parent=1 // pred_check
      _
    $region19: #{tpu_custom_call.1} parent=1 // pred_check_branch
      %35 = sbr.rel (0) target = $region21
    $region20: #{tpu_custom_call.1} parent=1 // pred_region
      _
    $region21: #{tpu_custom_call.1} parent=1 // pred_fallthru
      _
    // Predicated region
    $region22: #{tpu_custom_call.1} parent=1 // pred_check
      _
    $region23: #{tpu_custom_call.1} parent=1 // pred_check_branch
      %37 = sbr.rel (0) target = $region25
    $region24: #{tpu_custom_call.1} parent=1 // pred_region
      _
    $region25: #{tpu_custom_call.1} parent=1 // pred_fallthru
      _
    // Predicated region
    $region26: #{tpu_custom_call.1} parent=1 // pred_check
      _
    $region27: #{tpu_custom_call.1} parent=1 // pred_check_branch
      %39 = sbr.rel (0) target = $region29
    $region28: #{tpu_custom_call.1} parent=1 // pred_region
      _
    $region29: #{tpu_custom_call.1} parent=1 // pred_fallthru
      _
    // Predicated region
    $region30: #{tpu_custom_call.1} parent=1 // pred_check
      _
    $region31: #{tpu_custom_call.1} parent=1 // pred_check_branch
      %41 = sbr.rel (0) target = $region33
    $region32: #{tpu_custom_call.1} parent=1 // pred_region
      _
    $region33: #{tpu_custom_call.1} parent=1 // pred_fallthru
      _
    // Predicated region
    $region34: #{tpu_custom_call.1} parent=1 // pred_check
      _
    $region35: #{tpu_custom_call.1} parent=1 // pred_check_branch
      %43 = sbr.rel (0) target = $region37
    $region36: #{tpu_custom_call.1} parent=1 // pred_region
      _
    $region37: #{tpu_custom_call.1} parent=1 // pred_fallthru
      _
    // Predicated region
    $region38: #{tpu_custom_call.1} parent=1 // pred_check
      _
    $region39: #{tpu_custom_call.1} parent=1 // pred_check_branch
      %45 = sbr.rel (0) target = $region41
    $region40: #{tpu_custom_call.1} parent=1 // pred_region
      _
    $region41: #{tpu_custom_call.1} parent=1 // pred_fallthru
      _
    // Predicated region
    $region42: #{tpu_custom_call.1} parent=1 // pred_check
      _
    $region43: #{tpu_custom_call.1} parent=1 // pred_check_branch
      %47 = sbr.rel (0) target = $region45
    $region44: #{tpu_custom_call.1} parent=1 // pred_region
      _
    $region45: #{tpu_custom_call.1} parent=1 // pred_fallthru
      _
    // Predicated region
    $region46: #{tpu_custom_call.1} parent=1 // pred_check
      _
    $region47: #{tpu_custom_call.1} parent=1 // pred_check_branch
      %49 = sbr.rel (0) target = $region49
    $region48: #{tpu_custom_call.1} parent=1 // pred_region
      _
    $region49: #{tpu_custom_call.1} parent=1 // pred_fallthru
      _
    // Predicated region
    $region50: #{tpu_custom_call.1} parent=1 // pred_check
      _
    $region51: #{tpu_custom_call.1} parent=1 // pred_check_branch
      %51 = sbr.rel (0) target = $region53
    $region52: #{tpu_custom_call.1} parent=1 // pred_region
      _
    $region53: #{tpu_custom_call.1} parent=1 // pred_fallthru
      _
    // Predicated region
    $region54: #{tpu_custom_call.1} parent=1 // pred_check
      _
    $region55: #{tpu_custom_call.1} parent=1 // pred_check_branch
      %53 = sbr.rel (0) target = $region57
    $region56: #{tpu_custom_call.1} parent=1 // pred_region
      _
    $region57: #{tpu_custom_call.1} parent=1 // pred_fallthru
      _
    // Predicated region
    $region58: #{tpu_custom_call.1} parent=1 // pred_check
      _
    $region59: #{tpu_custom_call.1} parent=1 // pred_check_branch
      %55 = sbr.rel (0) target = $region61
    $region60: #{tpu_custom_call.1} parent=1 // pred_region
      _
    $region61: #{tpu_custom_call.1} parent=1 // pred_fallthru
      _
    // Predicated region
    $region62: #{tpu_custom_call.1} parent=1 // pred_check
      _
    $region63: #{tpu_custom_call.1} parent=1 // pred_check_branch
      %57 = sbr.rel (0) target = $region65
    $region64: #{tpu_custom_call.1} parent=1 // pred_region
      _
    $region65: #{tpu_custom_call.1} parent=1 // pred_fallthru
      _
    // Predicated region
    $region66: #{tpu_custom_call.1} parent=1 // pred_check
      _
    $region67: #{tpu_custom_call.1} parent=1 // pred_check_branch
      %59 = sbr.rel (0) target = $region69
    $region68: #{tpu_custom_call.1} parent=1 // pred_region
      _
    $region69: #{tpu_custom_call.1} parent=1 // pred_fallthru
      _
    // Predicated region
    $region70: #{tpu_custom_call.1} parent=1 // pred_check
      _
    $region71: #{tpu_custom_call.1} parent=1 // pred_check_branch
      %61 = sbr.rel (0) target = $region73
    $region72: #{tpu_custom_call.1} parent=1 // pred_region
      _
    $region73: #{tpu_custom_call.1} parent=1 // pred_fallthru
      _
    // Predicated region
    $region74: #{tpu_custom_call.1} parent=1 // pred_check
      _
    $region75: #{tpu_custom_call.1} parent=1 // pred_check_branch
      %63 = sbr.rel (0) target = $region77
    $region76: #{tpu_custom_call.1} parent=1 // pred_region
      _
    $region77: #{tpu_custom_call.1} parent=1 // pred_fallthru
      _
    // Predicated region
    $region78: #{tpu_custom_call.1} parent=1 // pred_check
      _
    $region79: #{tpu_custom_call.1} parent=1 // pred_check_branch
      %65 = sbr.rel (0) target = $region81
    $region80: #{tpu_custom_call.1} parent=1 // pred_region
      _
    $region81: #{tpu_custom_call.1} parent=1 // pred_fallthru
      _
    %v66 = vld [vmem:[%s0] sm:$0xff]
    %v67 = vld [vmem:[%s0 + $0x8] sm:$0xff]
    %v68 = vld [vmem:[%s3] sm:$0x3f]
    %v69 = vld [vmem:[%s4] sm:$0x1]
    %v71 = vlaneseq
    %v72 = vshrl.u32 %v71, 7
    %v73 = vsub.s32 0, %v72
    %v74 = vrot.slane %v69, %v73
    %vm76 = vcmask 48128
    %v78 = vsel %vm76, %v66, 0
    %v81 = vsel %vm76, %v67, 0
    %vm83 = vcmask 1045504
    %v85 = vsel %vm83, %v68, 0
    %87 = vmatprep.subr.mxu0 0.0
    %88 = vmatpush1.msra.mxu0 0.0
    %89 = vmatprep.subr.mxu0 0.0
    %90 = vmatpush1.msra.mxu0 0.0
    %91 = vmatprep.subr.mxu0 0.0
    %92 = vmatpush1.msra.mxu0 0.0
    %93 = vmatprep.subr.mxu0 0.0
    %94 = vmatpush1.msra.mxu0 0.0
    %95 = vmatprep.subr.mxu0 0.0
    %96 = vmatpush1.msra.mxu0 0.0
    %97 = vmatprep.subr.mxu0 0.0
    %98 = vmatpush1.msra.mxu0 0.0
    %99 = vmatprep.subr.mxu0 0.0
    %100 = vmatpush1.msra.mxu0 0.0
    %101 = vmatprep.subr.mxu0 0.0
    %102 = vmatpush1.msra.mxu0 0.0
    %103 = vmatprep.subr.mxu0 0.0
    %104 = vmatpush1.msra.mxu0 0.0
    %105 = vmatprep.subr.mxu0 0.0
    %106 = vmatpush1.msra.mxu0 0.0
    %107 = vmatprep.subr.mxu0 0.0
    %108 = vmatpush1.msra.mxu0 0.0
    %109 = vmatprep.subr.mxu0 0.0
    %110 = vmatpush1.msra.mxu0 0.0
    %111 = vmatprep.subr.mxu0 0.0
    %112 = vmatpush1.msra.mxu0 0.0
    %113 = vmatprep.subr.mxu0 0.0
    %114 = vmatpush1.msra.mxu0 0.0
    %115 = vmatprep.subr.mxu0 0.0
    %116 = vmatpush1.msra.mxu0 0.0
    %117 = vmatprep.subr.mxu0 0.0
    %118 = vmatpush1.msra.mxu0 %v85
    %119 = vmatprep.subr.mxu0 0.0
    %120 = vmatpush2.msra.mxu0 0.0
    %121 = vmatprep.subr.mxu0 0.0
    %122 = vmatpush2.msra.mxu0 0.0
    %123 = vmatprep.subr.mxu0 0.0
    %124 = vmatpush2.msra.mxu0 0.0
    %125 = vmatprep.subr.mxu0 0.0
    %126 = vmatpush2.msra.mxu0 0.0
    %127 = vmatprep.subr.mxu0 0.0
    %128 = vmatpush2.msra.mxu0 0.0
    %129 = vmatprep.subr.mxu0 0.0
    %130 = vmatpush2.msra.mxu0 0.0
    %131 = vmatprep.subr.mxu0 0.0
    %132 = vmatpush2.msra.mxu0 0.0
    %133 = vmatprep.subr.mxu0 0.0
    %134 = vmatpush2.msra.mxu0 0.0
    %135 = vmatprep.subr.mxu0 0.0
    %136 = vmatpush2.msra.mxu0 0.0
    %137 = vmatprep.subr.mxu0 0.0
    %138 = vmatpush2.msra.mxu0 0.0
    %139 = vmatprep.subr.mxu0 0.0
    %140 = vmatpush2.msra.mxu0 0.0
    %141 = vmatprep.subr.mxu0 0.0
    %142 = vmatpush2.msra.mxu0 0.0
    %143 = vmatprep.subr.mxu0 0.0
    %144 = vmatpush2.msra.mxu0 0.0
    %145 = vmatprep.subr.mxu0 0.0
    %146 = vmatpush2.msra.mxu0 0.0
    %147 = vmatprep.subr.mxu0 0.0
    %148 = vmatpush2.msra.mxu0 0.0
    %149 = vmatprep.subr.mxu0 0.0
    %150 = vmatpush2.msra.mxu0 0.0
    %151 = vmatprep.mubr.f32.mxu0 0.0
    %152 = vmatmul.mubr.f32.gmra.mxu0 %v78
    %v153 = vpop.f32.mrf.mxu0
    %v154 = vadd.f32 %v74, %v153
    %v155 = vpop.f32.mrf.mxu0
    %156 = vmatprep.mubr.f32.mxu0 0.0
    %157 = vmatmul.mubr.f32.gmra.mxu0 %v81
    %v158 = vpop.f32.mrf.mxu0
    %v159 = vadd.f32 %v74, %v158
    %v160 = vpop.f32.mrf.mxu0
    %161 = vdwg.mxu0
    %v162 = vtanh.pop %v154
    %v163 = vtanh.pop %v159
    %v164 = vld [vmem:[%s5] sm:$0x1]
    %v166 = vlaneseq
    %v167 = vshrl.u32 %v166, 7
    %v168 = vsub.s32 0, %v167
    %v169 = vrot.slane %v164, %v168
    %v171 = vmul.f32 %v162, %v169
    %v172 = vmul.f32 %v163, %v169
    %vm173 = vcmask 261120
    %v174 = vsel %vm173, %v171, 0.0
    %175 = vadd.xlane.f32.xlu0 %v174
    %v176 = vpop.xlane.xlu0 %175
    %v177 = vsel %vm173, %v172, 0.0
    %178 = vadd.xlane.f32.xlu0 %v177
    %v179 = vpop.xlane.xlu0 %178
    %v182 = vlaneseq
    %v183 = vand.u32 %v182, 127
    %v184 = vlaneseq
    %v185 = vshrl.u32 %v184, 7
    %v186 = vsub.s32 %v183, %v185
    %v187 = vrot.slane %v176, %v186
    %v188 = vlaneseq
    %v189 = vshrl.u32 %v188, 7
    %v190 = vsub.s32 %v183, %v189
    %v191 = vrot.slane %v179, %v190
    %vm192 = vcmask 1041409
    %v193 = vsel %vm192, %v191, %v187
    %vm195 = vcmask 58368
    %v196 = vsel %vm195, %v193, -inf
    %197 = vmax.xlane.f32.xlu0 %v196
    %v198 = vpop.xlane.xlu0 %197
    %v200 = vlaneseq
    %v201 = vshrl.u32 %v200, 7
    %v202 = vsub.s32 0, %v201
    %v203 = vrot.slane %v198, %v202
    %v204 = vlaneseq
    %v205 = vshrl.u32 %v204, 7
    %v206 = vsub.s32 1, %v205
    %v207 = vrot.slane %v198, %v206
    %v210 = vsub.f32 %v176, %v203
    %v211 = vsub.f32 %v179, %v207
    %v212 = vmul.f32 %v210, 1.442695
    %v213 = vpow.pop %v212
    %v214 = vmul.f32 %v211, 1.442695
    %v215 = vpow.pop %v214
    %218 = vset.pattern.permute.xlu0 0
    %219 = vperm.xlu0 %218, %v213
    %v220 = vpop.permute.xlu0 %219
    %221 = vset.pattern.permute.xlu0 0
    %222 = vperm.xlu0 %221, %v215
    %v223 = vpop.permute.xlu0 %222
    %v224 = vlaneseq
    %v225 = vshrl.u32 %v224, 7
    %v226 = vsub.s32 %v183, %v225
    %v227 = vrot.slane %v220, %v226
    %v228 = vlaneseq
    %v229 = vshrl.u32 %v228, 7
    %v230 = vsub.s32 %v183, %v229
    %v231 = vrot.slane %v223, %v230
    %v232 = vsel %vm192, %v231, %v227
    %v234 = vsel %vm195, %v232, 0.0
    %235 = vadd.xlane.f32.xlu0 %v234
    %v236 = vpop.xlane.xlu0 %235
    %vm237 = vcmask 64512
    %v238 = vsel %vm237, %v227, 0
    %240 = vmatprep.subr.mxu0 0.0
    %241 = vmatpush1.msra.mxu0 0.0
    %242 = vmatprep.subr.mxu0 0.0
    %243 = vmatpush1.msra.mxu0 0.0
    %244 = vmatprep.subr.mxu0 0.0
    %245 = vmatpush1.msra.mxu0 0.0
    %246 = vmatprep.subr.mxu0 0.0
    %247 = vmatpush1.msra.mxu0 0.0
    %248 = vmatprep.subr.mxu0 0.0
    %249 = vmatpush1.msra.mxu0 0.0
    %250 = vmatprep.subr.mxu0 0.0
    %251 = vmatpush1.msra.mxu0 0.0
    %252 = vmatprep.subr.mxu0 0.0
    %253 = vmatpush1.msra.mxu0 0.0
    %254 = vmatprep.subr.mxu0 0.0
    %255 = vmatpush1.msra.mxu0 0.0
    %256 = vmatprep.subr.mxu0 0.0
    %257 = vmatpush1.msra.mxu0 0.0
    %258 = vmatprep.subr.mxu0 0.0
    %259 = vmatpush1.msra.mxu0 0.0
    %260 = vmatprep.subr.mxu0 0.0
    %261 = vmatpush1.msra.mxu0 0.0
    %262 = vmatprep.subr.mxu0 0.0
    %263 = vmatpush1.msra.mxu0 0.0
    %264 = vmatprep.subr.mxu0 0.0
    %265 = vmatpush1.msra.mxu0 0.0
    %266 = vmatprep.subr.mxu0 0.0
    %267 = vmatpush1.msra.mxu0 0.0
    %268 = vmatprep.subr.mxu0 0.0
    %269 = vmatpush1.msra.mxu0 0.0
    %270 = vmatprep.subr.mxu0 0.0
    %271 = vmatpush1.msra.mxu0 %v66
    %272 = vmatprep.subr.mxu0 0.0
    %273 = vmatpush2.msra.mxu0 0.0
    %274 = vmatprep.subr.mxu0 0.0
    %275 = vmatpush2.msra.mxu0 0.0
    %276 = vmatprep.subr.mxu0 0.0
    %277 = vmatpush2.msra.mxu0 0.0
    %278 = vmatprep.subr.mxu0 0.0
    %279 = vmatpush2.msra.mxu0 0.0
    %280 = vmatprep.subr.mxu0 0.0
    %281 = vmatpush2.msra.mxu0 0.0
    %282 = vmatprep.subr.mxu0 0.0
    %283 = vmatpush2.msra.mxu0 0.0
    %284 = vmatprep.subr.mxu0 0.0
    %285 = vmatpush2.msra.mxu0 0.0
    %286 = vmatprep.subr.mxu0 0.0
    %287 = vmatpush2.msra.mxu0 0.0
    %288 = vmatprep.subr.mxu0 0.0
    %289 = vmatpush2.msra.mxu0 0.0
    %290 = vmatprep.subr.mxu0 0.0
    %291 = vmatpush2.msra.mxu0 0.0
    %292 = vmatprep.subr.mxu0 0.0
    %293 = vmatpush2.msra.mxu0 0.0
    %294 = vmatprep.subr.mxu0 0.0
    %295 = vmatpush2.msra.mxu0 0.0
    %296 = vmatprep.subr.mxu0 0.0
    %297 = vmatpush2.msra.mxu0 0.0
    %298 = vmatprep.subr.mxu0 0.0
    %299 = vmatpush2.msra.mxu0 0.0
    %300 = vmatprep.subr.mxu0 0.0
    %301 = vmatpush2.msra.mxu0 0.0
    %302 = vmatprep.subr.mxu0 0.0
    %303 = vmatpush2.msra.mxu0 0.0
    %304 = vmatprep.mubr.f32.mxu0 0.0
    %305 = vmatmul.mubr.f32.gmra.mxu0 %v238
    %v306 = vpop.f32.mrf.mxu0
    %v307 = vadd.f32 0.0, %v306
    %v308 = vpop.f32.mrf.mxu0
    %309 = vdwg.mxu0
    %v310 = vsel %vm237, %v231, 0
    %312 = vmatprep.subr.mxu0 0.0
    %313 = vmatpush1.msra.mxu0 0.0
    %314 = vmatprep.subr.mxu0 0.0
    %315 = vmatpush1.msra.mxu0 0.0
    %316 = vmatprep.subr.mxu0 0.0
    %317 = vmatpush1.msra.mxu0 0.0
    %318 = vmatprep.subr.mxu0 0.0
    %319 = vmatpush1.msra.mxu0 0.0
    %320 = vmatprep.subr.mxu0 0.0
    %321 = vmatpush1.msra.mxu0 0.0
    %322 = vmatprep.subr.mxu0 0.0
    %323 = vmatpush1.msra.mxu0 0.0
    %324 = vmatprep.subr.mxu0 0.0
    %325 = vmatpush1.msra.mxu0 0.0
    %326 = vmatprep.subr.mxu0 0.0
    %327 = vmatpush1.msra.mxu0 0.0
    %328 = vmatprep.subr.mxu0 0.0
    %329 = vmatpush1.msra.mxu0 0.0
    %330 = vmatprep.subr.mxu0 0.0
    %331 = vmatpush1.msra.mxu0 0.0
    %332 = vmatprep.subr.mxu0 0.0
    %333 = vmatpush1.msra.mxu0 0.0
    %334 = vmatprep.subr.mxu0 0.0
    %335 = vmatpush1.msra.mxu0 0.0
    %336 = vmatprep.subr.mxu0 0.0
    %337 = vmatpush1.msra.mxu0 0.0
    %338 = vmatprep.subr.mxu0 0.0
    %339 = vmatpush1.msra.mxu0 0.0
    %340 = vmatprep.subr.mxu0 0.0
    %341 = vmatpush1.msra.mxu0 0.0
    %342 = vmatprep.subr.mxu0 0.0
    %343 = vmatpush1.msra.mxu0 %v67
    %344 = vmatprep.subr.mxu0 0.0
    %345 = vmatpush2.msra.mxu0 0.0
    %346 = vmatprep.subr.mxu0 0.0
    %347 = vmatpush2.msra.mxu0 0.0
    %348 = vmatprep.subr.mxu0 0.0
    %349 = vmatpush2.msra.mxu0 0.0
    %350 = vmatprep.subr.mxu0 0.0
    %351 = vmatpush2.msra.mxu0 0.0
    %352 = vmatprep.subr.mxu0 0.0
    %353 = vmatpush2.msra.mxu0 0.0
    %354 = vmatprep.subr.mxu0 0.0
    %355 = vmatpush2.msra.mxu0 0.0
    %356 = vmatprep.subr.mxu0 0.0
    %357 = vmatpush2.msra.mxu0 0.0
    %358 = vmatprep.subr.mxu0 0.0
    %359 = vmatpush2.msra.mxu0 0.0
    %360 = vmatprep.subr.mxu0 0.0
    %361 = vmatpush2.msra.mxu0 0.0
    %362 = vmatprep.subr.mxu0 0.0
    %363 = vmatpush2.msra.mxu0 0.0
    %364 = vmatprep.subr.mxu0 0.0
    %365 = vmatpush2.msra.mxu0 0.0
    %366 = vmatprep.subr.mxu0 0.0
    %367 = vmatpush2.msra.mxu0 0.0
    %368 = vmatprep.subr.mxu0 0.0
    %369 = vmatpush2.msra.mxu0 0.0
    %370 = vmatprep.subr.mxu0 0.0
    %371 = vmatpush2.msra.mxu0 0.0
    %372 = vmatprep.subr.mxu0 0.0
    %373 = vmatpush2.msra.mxu0 0.0
    %374 = vmatprep.subr.mxu0 0.0
    %375 = vmatpush2.msra.mxu0 0.0
    %376 = vmatprep.mubr.f32.mxu0 0.0
    %377 = vmatmul.mubr.f32.gmra.mxu0 %v310
    %v378 = vpop.f32.mrf.mxu0
    %v379 = vadd.f32 0.0, %v378
    %v380 = vpop.f32.mrf.mxu0
    %381 = vdwg.mxu0
    %v382 = vrcp.pop %v236
    %v383 = vmul.f32 %v236, %v382
    %v384 = vsub.f32 2.0, %v383
    %v385 = vmul.f32 %v382, %v384
    %v387 = vrot.slane %v385, 1
    %v390 = vmul.f32 %v307, %v385
    %v391 = vmul.f32 %v379, %v387
    %v392 = vld [vmem:[%s1] sm:$0xff]
    %v393 = vld [vmem:[%s1 + $0x8] sm:$0xff]
    %v394 = vld [vmem:[%s6] sm:$0x1f]
    %v395 = vld [vmem:[%s7] sm:$0x1]
    %v397 = vlaneseq
    %v398 = vshrl.u32 %v397, 7
    %v399 = vsub.s32 0, %v398
    %v400 = vrot.slane %v395, %v399
    %vm402 = vcmask 39936
    %v404 = vsel %vm402, %v392, 0
    %v407 = vsel %vm402, %v393, 0
    %vm409 = vcmask 1044480
    %v411 = vsel %vm409, %v394, 0
    %413 = vmatprep.subr.mxu0 0.0
    %414 = vmatpush1.msra.mxu0 0.0
    %415 = vmatprep.subr.mxu0 0.0
    %416 = vmatpush1.msra.mxu0 0.0
    %417 = vmatprep.subr.mxu0 0.0
    %418 = vmatpush1.msra.mxu0 0.0
    %419 = vmatprep.subr.mxu0 0.0
    %420 = vmatpush1.msra.mxu0 0.0
    %421 = vmatprep.subr.mxu0 0.0
    %422 = vmatpush1.msra.mxu0 0.0
    %423 = vmatprep.subr.mxu0 0.0
    %424 = vmatpush1.msra.mxu0 0.0
    %425 = vmatprep.subr.mxu0 0.0
    %426 = vmatpush1.msra.mxu0 0.0
    %427 = vmatprep.subr.mxu0 0.0
    %428 = vmatpush1.msra.mxu0 0.0
    %429 = vmatprep.subr.mxu0 0.0
    %430 = vmatpush1.msra.mxu0 0.0
    %431 = vmatprep.subr.mxu0 0.0
    %432 = vmatpush1.msra.mxu0 0.0
    %433 = vmatprep.subr.mxu0 0.0
    %434 = vmatpush1.msra.mxu0 0.0
    %435 = vmatprep.subr.mxu0 0.0
    %436 = vmatpush1.msra.mxu0 0.0
    %437 = vmatprep.subr.mxu0 0.0
    %438 = vmatpush1.msra.mxu0 0.0
    %439 = vmatprep.subr.mxu0 0.0
    %440 = vmatpush1.msra.mxu0 0.0
    %441 = vmatprep.subr.mxu0 0.0
    %442 = vmatpush1.msra.mxu0 0.0
    %443 = vmatprep.subr.mxu0 0.0
    %444 = vmatpush1.msra.mxu0 %v411
    %445 = vmatprep.subr.mxu0 0.0
    %446 = vmatpush2.msra.mxu0 0.0
    %447 = vmatprep.subr.mxu0 0.0
    %448 = vmatpush2.msra.mxu0 0.0
    %449 = vmatprep.subr.mxu0 0.0
    %450 = vmatpush2.msra.mxu0 0.0
    %451 = vmatprep.subr.mxu0 0.0
    %452 = vmatpush2.msra.mxu0 0.0
    %453 = vmatprep.subr.mxu0 0.0
    %454 = vmatpush2.msra.mxu0 0.0
    %455 = vmatprep.subr.mxu0 0.0
    %456 = vmatpush2.msra.mxu0 0.0
    %457 = vmatprep.subr.mxu0 0.0
    %458 = vmatpush2.msra.mxu0 0.0
    %459 = vmatprep.subr.mxu0 0.0
    %460 = vmatpush2.msra.mxu0 0.0
    %461 = vmatprep.subr.mxu0 0.0
    %462 = vmatpush2.msra.mxu0 0.0
    %463 = vmatprep.subr.mxu0 0.0
    %464 = vmatpush2.msra.mxu0 0.0
    %465 = vmatprep.subr.mxu0 0.0
    %466 = vmatpush2.msra.mxu0 0.0
    %467 = vmatprep.subr.mxu0 0.0
    %468 = vmatpush2.msra.mxu0 0.0
    %469 = vmatprep.subr.mxu0 0.0
    %470 = vmatpush2.msra.mxu0 0.0
    %471 = vmatprep.subr.mxu0 0.0
    %472 = vmatpush2.msra.mxu0 0.0
    %473 = vmatprep.subr.mxu0 0.0
    %474 = vmatpush2.msra.mxu0 0.0
    %475 = vmatprep.subr.mxu0 0.0
    %476 = vmatpush2.msra.mxu0 0.0
    %477 = vmatprep.mubr.f32.mxu0 0.0
    %478 = vmatmul.mubr.f32.gmra.mxu0 %v404
    %v479 = vpop.f32.mrf.mxu0
    %v480 = vadd.f32 %v400, %v479
    %v481 = vpop.f32.mrf.mxu0
    %482 = vmatprep.mubr.f32.mxu0 0.0
    %483 = vmatmul.mubr.f32.gmra.mxu0 %v407
    %v484 = vpop.f32.mrf.mxu0
    %v485 = vadd.f32 %v400, %v484
    %v486 = vpop.f32.mrf.mxu0
    %487 = vdwg.mxu0
    %v488 = vtanh.pop %v480
    %v489 = vtanh.pop %v485
    %v490 = vld [vmem:[%s8] sm:$0x1]
    %v492 = vlaneseq
    %v493 = vshrl.u32 %v492, 7
    %v494 = vsub.s32 0, %v493
    %v495 = vrot.slane %v490, %v494
    %v497 = vmul.f32 %v488, %v495
    %v498 = vmul.f32 %v489, %v495
    %v499 = vsel %vm173, %v497, 0.0
    %500 = vadd.xlane.f32.xlu0 %v499
    %v501 = vpop.xlane.xlu0 %500
    %v502 = vsel %vm173, %v498, 0.0
    %503 = vadd.xlane.f32.xlu0 %v502
    %v504 = vpop.xlane.xlu0 %503
    %v507 = vlaneseq
    %v508 = vshrl.u32 %v507, 7
    %v509 = vsub.s32 %v183, %v508
    %v510 = vrot.slane %v501, %v509
    %v511 = vlaneseq
    %v512 = vshrl.u32 %v511, 7
    %v513 = vsub.s32 %v183, %v512
    %v514 = vrot.slane %v504, %v513
    %v515 = vsel %vm192, %v514, %v510
    %v517 = vsel %vm195, %v515, -inf
    %518 = vmax.xlane.f32.xlu0 %v517
    %v519 = vpop.xlane.xlu0 %518
    %v521 = vlaneseq
    %v522 = vshrl.u32 %v521, 7
    %v523 = vsub.s32 0, %v522
    %v524 = vrot.slane %v519, %v523
    %v525 = vlaneseq
    %v526 = vshrl.u32 %v525, 7
    %v527 = vsub.s32 1, %v526
    %v528 = vrot.slane %v519, %v527
    %v531 = vsub.f32 %v501, %v524
    %v532 = vsub.f32 %v504, %v528
    %v533 = vmul.f32 %v531, 1.442695
    %v534 = vpow.pop %v533
    %v535 = vmul.f32 %v532, 1.442695
    %v536 = vpow.pop %v535
    %539 = vset.pattern.permute.xlu0 0
    %540 = vperm.xlu0 %539, %v534
    %v541 = vpop.permute.xlu0 %540
    %542 = vset.pattern.permute.xlu0 0
    %543 = vperm.xlu0 %542, %v536
    %v544 = vpop.permute.xlu0 %543
    %v545 = vlaneseq
    %v546 = vshrl.u32 %v545, 7
    %v547 = vsub.s32 %v183, %v546
    %v548 = vrot.slane %v541, %v547
    %v549 = vlaneseq
    %v550 = vshrl.u32 %v549, 7
    %v551 = vsub.s32 %v183, %v550
    %v552 = vrot.slane %v544, %v551
    %v553 = vsel %vm192, %v552, %v548
    %v555 = vsel %vm195, %v553, 0.0
    %556 = vadd.xlane.f32.xlu0 %v555
    %v557 = vpop.xlane.xlu0 %556
    %v558 = vsel %vm237, %v548, 0
    %560 = vmatprep.subr.mxu0 0.0
    %561 = vmatpush1.msra.mxu0 0.0
    %562 = vmatprep.subr.mxu0 0.0
    %563 = vmatpush1.msra.mxu0 0.0
    %564 = vmatprep.subr.mxu0 0.0
    %565 = vmatpush1.msra.mxu0 0.0
    %566 = vmatprep.subr.mxu0 0.0
    %567 = vmatpush1.msra.mxu0 0.0
    %568 = vmatprep.subr.mxu0 0.0
    %569 = vmatpush1.msra.mxu0 0.0
    %570 = vmatprep.subr.mxu0 0.0
    %571 = vmatpush1.msra.mxu0 0.0
    %572 = vmatprep.subr.mxu0 0.0
    %573 = vmatpush1.msra.mxu0 0.0
    %574 = vmatprep.subr.mxu0 0.0
    %575 = vmatpush1.msra.mxu0 0.0
    %576 = vmatprep.subr.mxu0 0.0
    %577 = vmatpush1.msra.mxu0 0.0
    %578 = vmatprep.subr.mxu0 0.0
    %579 = vmatpush1.msra.mxu0 0.0
    %580 = vmatprep.subr.mxu0 0.0
    %581 = vmatpush1.msra.mxu0 0.0
    %582 = vmatprep.subr.mxu0 0.0
    %583 = vmatpush1.msra.mxu0 0.0
    %584 = vmatprep.subr.mxu0 0.0
    %585 = vmatpush1.msra.mxu0 0.0
    %586 = vmatprep.subr.mxu0 0.0
    %587 = vmatpush1.msra.mxu0 0.0
    %588 = vmatprep.subr.mxu0 0.0
    %589 = vmatpush1.msra.mxu0 0.0
    %590 = vmatprep.subr.mxu0 0.0
    %591 = vmatpush1.msra.mxu0 %v392
    %592 = vmatprep.subr.mxu0 0.0
    %593 = vmatpush2.msra.mxu0 0.0
    %594 = vmatprep.subr.mxu0 0.0
    %595 = vmatpush2.msra.mxu0 0.0
    %596 = vmatprep.subr.mxu0 0.0
    %597 = vmatpush2.msra.mxu0 0.0
    %598 = vmatprep.subr.mxu0 0.0
    %599 = vmatpush2.msra.mxu0 0.0
    %600 = vmatprep.subr.mxu0 0.0
    %601 = vmatpush2.msra.mxu0 0.0
    %602 = vmatprep.subr.mxu0 0.0
    %603 = vmatpush2.msra.mxu0 0.0
    %604 = vmatprep.subr.mxu0 0.0
    %605 = vmatpush2.msra.mxu0 0.0
    %606 = vmatprep.subr.mxu0 0.0
    %607 = vmatpush2.msra.mxu0 0.0
    %608 = vmatprep.subr.mxu0 0.0
    %609 = vmatpush2.msra.mxu0 0.0
    %610 = vmatprep.subr.mxu0 0.0
    %611 = vmatpush2.msra.mxu0 0.0
    %612 = vmatprep.subr.mxu0 0.0
    %613 = vmatpush2.msra.mxu0 0.0
    %614 = vmatprep.subr.mxu0 0.0
    %615 = vmatpush2.msra.mxu0 0.0
    %616 = vmatprep.subr.mxu0 0.0
    %617 = vmatpush2.msra.mxu0 0.0
    %618 = vmatprep.subr.mxu0 0.0
    %619 = vmatpush2.msra.mxu0 0.0
    %620 = vmatprep.subr.mxu0 0.0
    %621 = vmatpush2.msra.mxu0 0.0
    %622 = vmatprep.subr.mxu0 0.0
    %623 = vmatpush2.msra.mxu0 0.0
    %624 = vmatprep.mubr.f32.mxu0 0.0
    %625 = vmatmul.mubr.f32.gmra.mxu0 %v558
    %v626 = vpop.f32.mrf.mxu0
    %v627 = vadd.f32 0.0, %v626
    %v628 = vpop.f32.mrf.mxu0
    %629 = vdwg.mxu0
    %v630 = vsel %vm237, %v552, 0
    %632 = vmatprep.subr.mxu0 0.0
    %633 = vmatpush1.msra.mxu0 0.0
    %634 = vmatprep.subr.mxu0 0.0
    %635 = vmatpush1.msra.mxu0 0.0
    %636 = vmatprep.subr.mxu0 0.0
    %637 = vmatpush1.msra.mxu0 0.0
    %638 = vmatprep.subr.mxu0 0.0
    %639 = vmatpush1.msra.mxu0 0.0
    %640 = vmatprep.subr.mxu0 0.0
    %641 = vmatpush1.msra.mxu0 0.0
    %642 = vmatprep.subr.mxu0 0.0
    %643 = vmatpush1.msra.mxu0 0.0
    %644 = vmatprep.subr.mxu0 0.0
    %645 = vmatpush1.msra.mxu0 0.0
    %646 = vmatprep.subr.mxu0 0.0
    %647 = vmatpush1.msra.mxu0 0.0
    %648 = vmatprep.subr.mxu0 0.0
    %649 = vmatpush1.msra.mxu0 0.0
    %650 = vmatprep.subr.mxu0 0.0
    %651 = vmatpush1.msra.mxu0 0.0
    %652 = vmatprep.subr.mxu0 0.0
    %653 = vmatpush1.msra.mxu0 0.0
    %654 = vmatprep.subr.mxu0 0.0
    %655 = vmatpush1.msra.mxu0 0.0
    %656 = vmatprep.subr.mxu0 0.0
    %657 = vmatpush1.msra.mxu0 0.0
    %658 = vmatprep.subr.mxu0 0.0
    %659 = vmatpush1.msra.mxu0 0.0
    %660 = vmatprep.subr.mxu0 0.0
    %661 = vmatpush1.msra.mxu0 0.0
    %662 = vmatprep.subr.mxu0 0.0
    %663 = vmatpush1.msra.mxu0 %v393
    %664 = vmatprep.subr.mxu0 0.0
    %665 = vmatpush2.msra.mxu0 0.0
    %666 = vmatprep.subr.mxu0 0.0
    %667 = vmatpush2.msra.mxu0 0.0
    %668 = vmatprep.subr.mxu0 0.0
    %669 = vmatpush2.msra.mxu0 0.0
    %670 = vmatprep.subr.mxu0 0.0
    %671 = vmatpush2.msra.mxu0 0.0
    %672 = vmatprep.subr.mxu0 0.0
    %673 = vmatpush2.msra.mxu0 0.0
    %674 = vmatprep.subr.mxu0 0.0
    %675 = vmatpush2.msra.mxu0 0.0
    %676 = vmatprep.subr.mxu0 0.0
    %677 = vmatpush2.msra.mxu0 0.0
    %678 = vmatprep.subr.mxu0 0.0
    %679 = vmatpush2.msra.mxu0 0.0
    %680 = vmatprep.subr.mxu0 0.0
    %681 = vmatpush2.msra.mxu0 0.0
    %682 = vmatprep.subr.mxu0 0.0
    %683 = vmatpush2.msra.mxu0 0.0
    %684 = vmatprep.subr.mxu0 0.0
    %685 = vmatpush2.msra.mxu0 0.0
    %686 = vmatprep.subr.mxu0 0.0
    %687 = vmatpush2.msra.mxu0 0.0
    %688 = vmatprep.subr.mxu0 0.0
    %689 = vmatpush2.msra.mxu0 0.0
    %690 = vmatprep.subr.mxu0 0.0
    %691 = vmatpush2.msra.mxu0 0.0
    %692 = vmatprep.subr.mxu0 0.0
    %693 = vmatpush2.msra.mxu0 0.0
    %694 = vmatprep.subr.mxu0 0.0
    %695 = vmatpush2.msra.mxu0 0.0
    %696 = vmatprep.mubr.f32.mxu0 0.0
    %697 = vmatmul.mubr.f32.gmra.mxu0 %v630
    %v698 = vpop.f32.mrf.mxu0
    %v699 = vadd.f32 0.0, %v698
    %v700 = vpop.f32.mrf.mxu0
    %701 = vdwg.mxu0
    %v702 = vrcp.pop %v557
    %v703 = vmul.f32 %v557, %v702
    %v704 = vsub.f32 2.0, %v703
    %v705 = vmul.f32 %v702, %v704
    %v707 = vrot.slane %v705, 1
    %v710 = vmul.f32 %v627, %v705
    %v711 = vmul.f32 %v699, %v707
    %v712 = vld [vmem:[%s2] sm:$0xff]
    %v713 = vld [vmem:[%s2 + $0x8] sm:$0xff]
    %v714 = vld [vmem:[%s9] sm:$0x7f]
    %v715 = vld [vmem:[%s10] sm:$0x1]
    %v717 = vlaneseq
    %v718 = vshrl.u32 %v717, 7
    %v719 = vsub.s32 0, %v718
    %v720 = vrot.slane %v715, %v719
    %vm722 = vcmask 56320
    %v724 = vsel %vm722, %v712, 0
    %v727 = vsel %vm722, %v713, 0
    %vm729 = vcmask 1046528
    %v731 = vsel %vm729, %v714, 0
    %733 = vmatprep.subr.mxu0 0.0
    %734 = vmatpush1.msra.mxu0 0.0
    %735 = vmatprep.subr.mxu0 0.0
    %736 = vmatpush1.msra.mxu0 0.0
    %737 = vmatprep.subr.mxu0 0.0
    %738 = vmatpush1.msra.mxu0 0.0
    %739 = vmatprep.subr.mxu0 0.0
    %740 = vmatpush1.msra.mxu0 0.0
    %741 = vmatprep.subr.mxu0 0.0
    %742 = vmatpush1.msra.mxu0 0.0
    %743 = vmatprep.subr.mxu0 0.0
    %744 = vmatpush1.msra.mxu0 0.0
    %745 = vmatprep.subr.mxu0 0.0
    %746 = vmatpush1.msra.mxu0 0.0
    %747 = vmatprep.subr.mxu0 0.0
    %748 = vmatpush1.msra.mxu0 0.0
    %749 = vmatprep.subr.mxu0 0.0
    %750 = vmatpush1.msra.mxu0 0.0
    %751 = vmatprep.subr.mxu0 0.0
    %752 = vmatpush1.msra.mxu0 0.0
    %753 = vmatprep.subr.mxu0 0.0
    %754 = vmatpush1.msra.mxu0 0.0
    %755 = vmatprep.subr.mxu0 0.0
    %756 = vmatpush1.msra.mxu0 0.0
    %757 = vmatprep.subr.mxu0 0.0
    %758 = vmatpush1.msra.mxu0 0.0
    %759 = vmatprep.subr.mxu0 0.0
    %760 = vmatpush1.msra.mxu0 0.0
    %761 = vmatprep.subr.mxu0 0.0
    %762 = vmatpush1.msra.mxu0 0.0
    %763 = vmatprep.subr.mxu0 0.0
    %764 = vmatpush1.msra.mxu0 %v731
    %765 = vmatprep.subr.mxu0 0.0
    %766 = vmatpush2.msra.mxu0 0.0
    %767 = vmatprep.subr.mxu0 0.0
    %768 = vmatpush2.msra.mxu0 0.0
    %769 = vmatprep.subr.mxu0 0.0
    %770 = vmatpush2.msra.mxu0 0.0
    %771 = vmatprep.subr.mxu0 0.0
    %772 = vmatpush2.msra.mxu0 0.0
    %773 = vmatprep.subr.mxu0 0.0
    %774 = vmatpush2.msra.mxu0 0.0
    %775 = vmatprep.subr.mxu0 0.0
    %776 = vmatpush2.msra.mxu0 0.0
    %777 = vmatprep.subr.mxu0 0.0
    %778 = vmatpush2.msra.mxu0 0.0
    %779 = vmatprep.subr.mxu0 0.0
    %780 = vmatpush2.msra.mxu0 0.0
    %781 = vmatprep.subr.mxu0 0.0
    %782 = vmatpush2.msra.mxu0 0.0
    %783 = vmatprep.subr.mxu0 0.0
    %784 = vmatpush2.msra.mxu0 0.0
    %785 = vmatprep.subr.mxu0 0.0
    %786 = vmatpush2.msra.mxu0 0.0
    %787 = vmatprep.subr.mxu0 0.0
    %788 = vmatpush2.msra.mxu0 0.0
    %789 = vmatprep.subr.mxu0 0.0
    %790 = vmatpush2.msra.mxu0 0.0
    %791 = vmatprep.subr.mxu0 0.0
    %792 = vmatpush2.msra.mxu0 0.0
    %793 = vmatprep.subr.mxu0 0.0
    %794 = vmatpush2.msra.mxu0 0.0
    %795 = vmatprep.subr.mxu0 0.0
    %796 = vmatpush2.msra.mxu0 0.0
    %797 = vmatprep.mubr.f32.mxu0 0.0
    %798 = vmatmul.mubr.f32.gmra.mxu0 %v724
    %v799 = vpop.f32.mrf.mxu0
    %v800 = vadd.f32 %v720, %v799
    %v801 = vpop.f32.mrf.mxu0
    %802 = vmatprep.mubr.f32.mxu0 0.0
    %803 = vmatmul.mubr.f32.gmra.mxu0 %v727
    %v804 = vpop.f32.mrf.mxu0
    %v805 = vadd.f32 %v720, %v804
    %v806 = vpop.f32.mrf.mxu0
    %807 = vdwg.mxu0
    %v808 = vtanh.pop %v800
    %v809 = vtanh.pop %v805
    %v810 = vld [vmem:[%s11] sm:$0x1]
    %v812 = vlaneseq
    %v813 = vshrl.u32 %v812, 7
    %v814 = vsub.s32 0, %v813
    %v815 = vrot.slane %v810, %v814
    %v817 = vmul.f32 %v808, %v815
    %v818 = vmul.f32 %v809, %v815
    %v819 = vsel %vm173, %v817, 0.0
    %820 = vadd.xlane.f32.xlu0 %v819
    %v821 = vpop.xlane.xlu0 %820
    %v822 = vsel %vm173, %v818, 0.0
    %823 = vadd.xlane.f32.xlu0 %v822
    %v824 = vpop.xlane.xlu0 %823
    %v827 = vlaneseq
    %v828 = vshrl.u32 %v827, 7
    %v829 = vsub.s32 %v183, %v828
    %v830 = vrot.slane %v821, %v829
    %v831 = vlaneseq
    %v832 = vshrl.u32 %v831, 7
    %v833 = vsub.s32 %v183, %v832
    %v834 = vrot.slane %v824, %v833
    %v835 = vsel %vm192, %v834, %v830
    %v837 = vsel %vm195, %v835, -inf
    %838 = vmax.xlane.f32.xlu0 %v837
    %v839 = vpop.xlane.xlu0 %838
    %v841 = vlaneseq
    %v842 = vshrl.u32 %v841, 7
    %v843 = vsub.s32 0, %v842
    %v844 = vrot.slane %v839, %v843
    %v845 = vlaneseq
    %v846 = vshrl.u32 %v845, 7
    %v847 = vsub.s32 1, %v846
    %v848 = vrot.slane %v839, %v847
    %v851 = vsub.f32 %v821, %v844
    %v852 = vsub.f32 %v824, %v848
    %v853 = vmul.f32 %v851, 1.442695
    %v854 = vpow.pop %v853
    %v855 = vmul.f32 %v852, 1.442695
    %v856 = vpow.pop %v855
    %859 = vset.pattern.permute.xlu0 0
    %860 = vperm.xlu0 %859, %v854
    %v861 = vpop.permute.xlu0 %860
    %862 = vset.pattern.permute.xlu0 0
    %863 = vperm.xlu0 %862, %v856
    %v864 = vpop.permute.xlu0 %863
    %v865 = vlaneseq
    %v866 = vshrl.u32 %v865, 7
    %v867 = vsub.s32 %v183, %v866
    %v868 = vrot.slane %v861, %v867
    %v869 = vlaneseq
    %v870 = vshrl.u32 %v869, 7
    %v871 = vsub.s32 %v183, %v870
    %v872 = vrot.slane %v864, %v871
    %v873 = vsel %vm192, %v872, %v868
    %v875 = vsel %vm195, %v873, 0.0
    %876 = vadd.xlane.f32.xlu0 %v875
    %v877 = vpop.xlane.xlu0 %876
    %v878 = vsel %vm237, %v868, 0
    %880 = vmatprep.subr.mxu0 0.0
    %881 = vmatpush1.msra.mxu0 0.0
    %882 = vmatprep.subr.mxu0 0.0
    %883 = vmatpush1.msra.mxu0 0.0
    %884 = vmatprep.subr.mxu0 0.0
    %885 = vmatpush1.msra.mxu0 0.0
    %886 = vmatprep.subr.mxu0 0.0
    %887 = vmatpush1.msra.mxu0 0.0
    %888 = vmatprep.subr.mxu0 0.0
    %889 = vmatpush1.msra.mxu0 0.0
    %890 = vmatprep.subr.mxu0 0.0
    %891 = vmatpush1.msra.mxu0 0.0
    %892 = vmatprep.subr.mxu0 0.0
    %893 = vmatpush1.msra.mxu0 0.0
    %894 = vmatprep.subr.mxu0 0.0
    %895 = vmatpush1.msra.mxu0 0.0
    %896 = vmatprep.subr.mxu0 0.0
    %897 = vmatpush1.msra.mxu0 0.0
    %898 = vmatprep.subr.mxu0 0.0
    %899 = vmatpush1.msra.mxu0 0.0
    %900 = vmatprep.subr.mxu0 0.0
    %901 = vmatpush1.msra.mxu0 0.0
    %902 = vmatprep.subr.mxu0 0.0
    %903 = vmatpush1.msra.mxu0 0.0
    %904 = vmatprep.subr.mxu0 0.0
    %905 = vmatpush1.msra.mxu0 0.0
    %906 = vmatprep.subr.mxu0 0.0
    %907 = vmatpush1.msra.mxu0 0.0
    %908 = vmatprep.subr.mxu0 0.0
    %909 = vmatpush1.msra.mxu0 0.0
    %910 = vmatprep.subr.mxu0 0.0
    %911 = vmatpush1.msra.mxu0 %v712
    %912 = vmatprep.subr.mxu0 0.0
    %913 = vmatpush2.msra.mxu0 0.0
    %914 = vmatprep.subr.mxu0 0.0
    %915 = vmatpush2.msra.mxu0 0.0
    %916 = vmatprep.subr.mxu0 0.0
    %917 = vmatpush2.msra.mxu0 0.0
    %918 = vmatprep.subr.mxu0 0.0
    %919 = vmatpush2.msra.mxu0 0.0
    %920 = vmatprep.subr.mxu0 0.0
    %921 = vmatpush2.msra.mxu0 0.0
    %922 = vmatprep.subr.mxu0 0.0
    %923 = vmatpush2.msra.mxu0 0.0
    %924 = vmatprep.subr.mxu0 0.0
    %925 = vmatpush2.msra.mxu0 0.0
    %926 = vmatprep.subr.mxu0 0.0
    %927 = vmatpush2.msra.mxu0 0.0
    %928 = vmatprep.subr.mxu0 0.0
    %929 = vmatpush2.msra.mxu0 0.0
    %930 = vmatprep.subr.mxu0 0.0
    %931 = vmatpush2.msra.mxu0 0.0
    %932 = vmatprep.subr.mxu0 0.0
    %933 = vmatpush2.msra.mxu0 0.0
    %934 = vmatprep.subr.mxu0 0.0
    %935 = vmatpush2.msra.mxu0 0.0
    %936 = vmatprep.subr.mxu0 0.0
    %937 = vmatpush2.msra.mxu0 0.0
    %938 = vmatprep.subr.mxu0 0.0
    %939 = vmatpush2.msra.mxu0 0.0
    %940 = vmatprep.subr.mxu0 0.0
    %941 = vmatpush2.msra.mxu0 0.0
    %942 = vmatprep.subr.mxu0 0.0
    %943 = vmatpush2.msra.mxu0 0.0
    %944 = vmatprep.mubr.f32.mxu0 0.0
    %945 = vmatmul.mubr.f32.gmra.mxu0 %v878
    %v946 = vpop.f32.mrf.mxu0
    %v947 = vadd.f32 0.0, %v946
    %v948 = vpop.f32.mrf.mxu0
    %949 = vdwg.mxu0
    %v950 = vsel %vm237, %v872, 0
    %952 = vmatprep.subr.mxu0 0.0
    %953 = vmatpush1.msra.mxu0 0.0
    %954 = vmatprep.subr.mxu0 0.0
    %955 = vmatpush1.msra.mxu0 0.0
    %956 = vmatprep.subr.mxu0 0.0
    %957 = vmatpush1.msra.mxu0 0.0
    %958 = vmatprep.subr.mxu0 0.0
    %959 = vmatpush1.msra.mxu0 0.0
    %960 = vmatprep.subr.mxu0 0.0
    %961 = vmatpush1.msra.mxu0 0.0
    %962 = vmatprep.subr.mxu0 0.0
    %963 = vmatpush1.msra.mxu0 0.0
    %964 = vmatprep.subr.mxu0 0.0
    %965 = vmatpush1.msra.mxu0 0.0
    %966 = vmatprep.subr.mxu0 0.0
    %967 = vmatpush1.msra.mxu0 0.0
    %968 = vmatprep.subr.mxu0 0.0
    %969 = vmatpush1.msra.mxu0 0.0
    %970 = vmatprep.subr.mxu0 0.0
    %971 = vmatpush1.msra.mxu0 0.0
    %972 = vmatprep.subr.mxu0 0.0
    %973 = vmatpush1.msra.mxu0 0.0
    %974 = vmatprep.subr.mxu0 0.0
    %975 = vmatpush1.msra.mxu0 0.0
    %976 = vmatprep.subr.mxu0 0.0
    %977 = vmatpush1.msra.mxu0 0.0
    %978 = vmatprep.subr.mxu0 0.0
    %979 = vmatpush1.msra.mxu0 0.0
    %980 = vmatprep.subr.mxu0 0.0
    %981 = vmatpush1.msra.mxu0 0.0
    %982 = vmatprep.subr.mxu0 0.0
    %983 = vmatpush1.msra.mxu0 %v713
    %984 = vmatprep.subr.mxu0 0.0
    %985 = vmatpush2.msra.mxu0 0.0
    %986 = vmatprep.subr.mxu0 0.0
    %987 = vmatpush2.msra.mxu0 0.0
    %988 = vmatprep.subr.mxu0 0.0
    %989 = vmatpush2.msra.mxu0 0.0
    %990 = vmatprep.subr.mxu0 0.0
    %991 = vmatpush2.msra.mxu0 0.0
    %992 = vmatprep.subr.mxu0 0.0
    %993 = vmatpush2.msra.mxu0 0.0
    %994 = vmatprep.subr.mxu0 0.0
    %995 = vmatpush2.msra.mxu0 0.0
    %996 = vmatprep.subr.mxu0 0.0
    %997 = vmatpush2.msra.mxu0 0.0
    %998 = vmatprep.subr.mxu0 0.0
    %999 = vmatpush2.msra.mxu0 0.0
    %1000 = vmatprep.subr.mxu0 0.0
    %1001 = vmatpush2.msra.mxu0 0.0
    %1002 = vmatprep.subr.mxu0 0.0
    %1003 = vmatpush2.msra.mxu0 0.0
    %1004 = vmatprep.subr.mxu0 0.0
    %1005 = vmatpush2.msra.mxu0 0.0
    %1006 = vmatprep.subr.mxu0 0.0
    %1007 = vmatpush2.msra.mxu0 0.0
    %1008 = vmatprep.subr.mxu0 0.0
    %1009 = vmatpush2.msra.mxu0 0.0
    %1010 = vmatprep.subr.mxu0 0.0
    %1011 = vmatpush2.msra.mxu0 0.0
    %1012 = vmatprep.subr.mxu0 0.0
    %1013 = vmatpush2.msra.mxu0 0.0
    %1014 = vmatprep.subr.mxu0 0.0
    %1015 = vmatpush2.msra.mxu0 0.0
    %1016 = vmatprep.mubr.f32.mxu0 0.0
    %1017 = vmatmul.mubr.f32.gmra.mxu0 %v950
    %v1018 = vpop.f32.mrf.mxu0
    %v1019 = vadd.f32 0.0, %v1018
    %v1020 = vpop.f32.mrf.mxu0
    %1021 = vdwg.mxu0
    %v1022 = vrcp.pop %v877
    %v1023 = vmul.f32 %v877, %v1022
    %v1024 = vsub.f32 2.0, %v1023
    %v1025 = vmul.f32 %v1022, %v1024
    %v1027 = vrot.slane %v1025, 1
    %v1030 = vmul.f32 %v947, %v1025
    %v1031 = vmul.f32 %v1019, %v1027
    %v1032 = vld [vmem:[%s12] sm:$0x3f]
    %v1033 = vld [vmem:[%s13] sm:$0x1f]
    %v1036 = vrot.slane %v711, 7
    %v1037 = vsel %vm192, %v1036, %v710
    %v1038 = vsel %vm402, %v1037, 0
    %v1041 = vsel %vm409, %v1033, 0
    %1043 = vmatprep.subr.mxu0 0.0
    %1044 = vmatpush1.msra.mxu0 0.0
    %1045 = vmatprep.subr.mxu0 0.0
    %1046 = vmatpush1.msra.mxu0 0.0
    %1047 = vmatprep.subr.mxu0 0.0
    %1048 = vmatpush1.msra.mxu0 0.0
    %1049 = vmatprep.subr.mxu0 0.0
    %1050 = vmatpush1.msra.mxu0 0.0
    %1051 = vmatprep.subr.mxu0 0.0
    %1052 = vmatpush1.msra.mxu0 0.0
    %1053 = vmatprep.subr.mxu0 0.0
    %1054 = vmatpush1.msra.mxu0 0.0
    %1055 = vmatprep.subr.mxu0 0.0
    %1056 = vmatpush1.msra.mxu0 0.0
    %1057 = vmatprep.subr.mxu0 0.0
    %1058 = vmatpush1.msra.mxu0 0.0
    %1059 = vmatprep.subr.mxu0 0.0
    %1060 = vmatpush1.msra.mxu0 0.0
    %1061 = vmatprep.subr.mxu0 0.0
    %1062 = vmatpush1.msra.mxu0 0.0
    %1063 = vmatprep.subr.mxu0 0.0
    %1064 = vmatpush1.msra.mxu0 0.0
    %1065 = vmatprep.subr.mxu0 0.0
    %1066 = vmatpush1.msra.mxu0 0.0
    %1067 = vmatprep.subr.mxu0 0.0
    %1068 = vmatpush1.msra.mxu0 0.0
    %1069 = vmatprep.subr.mxu0 0.0
    %1070 = vmatpush1.msra.mxu0 0.0
    %1071 = vmatprep.subr.mxu0 0.0
    %1072 = vmatpush1.msra.mxu0 0.0
    %1073 = vmatprep.subr.mxu0 0.0
    %1074 = vmatpush1.msra.mxu0 %v1041
    %1075 = vmatprep.subr.mxu0 0.0
    %1076 = vmatpush2.msra.mxu0 0.0
    %1077 = vmatprep.subr.mxu0 0.0
    %1078 = vmatpush2.msra.mxu0 0.0
    %1079 = vmatprep.subr.mxu0 0.0
    %1080 = vmatpush2.msra.mxu0 0.0
    %1081 = vmatprep.subr.mxu0 0.0
    %1082 = vmatpush2.msra.mxu0 0.0
    %1083 = vmatprep.subr.mxu0 0.0
    %1084 = vmatpush2.msra.mxu0 0.0
    %1085 = vmatprep.subr.mxu0 0.0
    %1086 = vmatpush2.msra.mxu0 0.0
    %1087 = vmatprep.subr.mxu0 0.0
    %1088 = vmatpush2.msra.mxu0 0.0
    %1089 = vmatprep.subr.mxu0 0.0
    %1090 = vmatpush2.msra.mxu0 0.0
    %1091 = vmatprep.subr.mxu0 0.0
    %1092 = vmatpush2.msra.mxu0 0.0
    %1093 = vmatprep.subr.mxu0 0.0
    %1094 = vmatpush2.msra.mxu0 0.0
    %1095 = vmatprep.subr.mxu0 0.0
    %1096 = vmatpush2.msra.mxu0 0.0
    %1097 = vmatprep.subr.mxu0 0.0
    %1098 = vmatpush2.msra.mxu0 0.0
    %1099 = vmatprep.subr.mxu0 0.0
    %1100 = vmatpush2.msra.mxu0 0.0
    %1101 = vmatprep.subr.mxu0 0.0
    %1102 = vmatpush2.msra.mxu0 0.0
    %1103 = vmatprep.subr.mxu0 0.0
    %1104 = vmatpush2.msra.mxu0 0.0
    %1105 = vmatprep.subr.mxu0 0.0
    %1106 = vmatpush2.msra.mxu0 0.0
    %1107 = vmatprep.mubr.f32.mxu0 0.0
    %1108 = vmatmul.mubr.f32.gmra.mxu0 %v1038
    %v1109 = vpop.f32.mrf.mxu0
    %v1110 = vadd.f32 0.0, %v1109
    %v1111 = vpop.f32.mrf.mxu0
    %1112 = vdwg.mxu0
    %v1115 = vrot.slane %v391, 7
    %v1116 = vsel %vm192, %v1115, %v390
    %v1117 = vsel %vm76, %v1116, 0
    %v1120 = vsel %vm83, %v1032, 0
    %1122 = vmatprep.subr.mxu0 0.0
    %1123 = vmatpush1.msra.mxu0 0.0
    %1124 = vmatprep.subr.mxu0 0.0
    %1125 = vmatpush1.msra.mxu0 0.0
    %1126 = vmatprep.subr.mxu0 0.0
    %1127 = vmatpush1.msra.mxu0 0.0
    %1128 = vmatprep.subr.mxu0 0.0
    %1129 = vmatpush1.msra.mxu0 0.0
    %1130 = vmatprep.subr.mxu0 0.0
    %1131 = vmatpush1.msra.mxu0 0.0
    %1132 = vmatprep.subr.mxu0 0.0
    %1133 = vmatpush1.msra.mxu0 0.0
    %1134 = vmatprep.subr.mxu0 0.0
    %1135 = vmatpush1.msra.mxu0 0.0
    %1136 = vmatprep.subr.mxu0 0.0
    %1137 = vmatpush1.msra.mxu0 0.0
    %1138 = vmatprep.subr.mxu0 0.0
    %1139 = vmatpush1.msra.mxu0 0.0
    %1140 = vmatprep.subr.mxu0 0.0
    %1141 = vmatpush1.msra.mxu0 0.0
    %1142 = vmatprep.subr.mxu0 0.0
    %1143 = vmatpush1.msra.mxu0 0.0
    %1144 = vmatprep.subr.mxu0 0.0
    %1145 = vmatpush1.msra.mxu0 0.0
    %1146 = vmatprep.subr.mxu0 0.0
    %1147 = vmatpush1.msra.mxu0 0.0
    %1148 = vmatprep.subr.mxu0 0.0
    %1149 = vmatpush1.msra.mxu0 0.0
    %1150 = vmatprep.subr.mxu0 0.0
    %1151 = vmatpush1.msra.mxu0 0.0
    %1152 = vmatprep.subr.mxu0 0.0
    %1153 = vmatpush1.msra.mxu0 %v1120
    %1154 = vmatprep.subr.mxu0 0.0
    %1155 = vmatpush2.msra.mxu0 0.0
    %1156 = vmatprep.subr.mxu0 0.0
    %1157 = vmatpush2.msra.mxu0 0.0
    %1158 = vmatprep.subr.mxu0 0.0
    %1159 = vmatpush2.msra.mxu0 0.0
    %1160 = vmatprep.subr.mxu0 0.0
    %1161 = vmatpush2.msra.mxu0 0.0
    %1162 = vmatprep.subr.mxu0 0.0
    %1163 = vmatpush2.msra.mxu0 0.0
    %1164 = vmatprep.subr.mxu0 0.0
    %1165 = vmatpush2.msra.mxu0 0.0
    %1166 = vmatprep.subr.mxu0 0.0
    %1167 = vmatpush2.msra.mxu0 0.0
    %1168 = vmatprep.subr.mxu0 0.0
    %1169 = vmatpush2.msra.mxu0 0.0
    %1170 = vmatprep.subr.mxu0 0.0
    %1171 = vmatpush2.msra.mxu0 0.0
    %1172 = vmatprep.subr.mxu0 0.0
    %1173 = vmatpush2.msra.mxu0 0.0
    %1174 = vmatprep.subr.mxu0 0.0
    %1175 = vmatpush2.msra.mxu0 0.0
    %1176 = vmatprep.subr.mxu0 0.0
    %1177 = vmatpush2.msra.mxu0 0.0
    %1178 = vmatprep.subr.mxu0 0.0
    %1179 = vmatpush2.msra.mxu0 0.0
    %1180 = vmatprep.subr.mxu0 0.0
    %1181 = vmatpush2.msra.mxu0 0.0
    %1182 = vmatprep.subr.mxu0 0.0
    %1183 = vmatpush2.msra.mxu0 0.0
    %1184 = vmatprep.subr.mxu0 0.0
    %1185 = vmatpush2.msra.mxu0 0.0
    %1186 = vmatprep.mubr.f32.mxu0 0.0
    %1187 = vmatmul.mubr.f32.gmra.mxu0 %v1117
    %v1188 = vpop.f32.mrf.mxu0
    %v1189 = vadd.f32 %v1110, %v1188
    %v1190 = vpop.f32.mrf.mxu0
    %1191 = vdwg.mxu0
    %v1192 = vld [vmem:[%s14] sm:$0x7f]
    %v1195 = vrot.slane %v1031, 7
    %v1196 = vsel %vm192, %v1195, %v1030
    %v1197 = vsel %vm722, %v1196, 0
    %v1200 = vsel %vm729, %v1192, 0
    %1202 = vmatprep.subr.mxu0 0.0
    %1203 = vmatpush1.msra.mxu0 0.0
    %1204 = vmatprep.subr.mxu0 0.0
    %1205 = vmatpush1.msra.mxu0 0.0
    %1206 = vmatprep.subr.mxu0 0.0
    %1207 = vmatpush1.msra.mxu0 0.0
    %1208 = vmatprep.subr.mxu0 0.0
    %1209 = vmatpush1.msra.mxu0 0.0
    %1210 = vmatprep.subr.mxu0 0.0
    %1211 = vmatpush1.msra.mxu0 0.0
    %1212 = vmatprep.subr.mxu0 0.0
    %1213 = vmatpush1.msra.mxu0 0.0
    %1214 = vmatprep.subr.mxu0 0.0
    %1215 = vmatpush1.msra.mxu0 0.0
    %1216 = vmatprep.subr.mxu0 0.0
    %1217 = vmatpush1.msra.mxu0 0.0
    %1218 = vmatprep.subr.mxu0 0.0
    %1219 = vmatpush1.msra.mxu0 0.0
    %1220 = vmatprep.subr.mxu0 0.0
    %1221 = vmatpush1.msra.mxu0 0.0
    %1222 = vmatprep.subr.mxu0 0.0
    %1223 = vmatpush1.msra.mxu0 0.0
    %1224 = vmatprep.subr.mxu0 0.0
    %1225 = vmatpush1.msra.mxu0 0.0
    %1226 = vmatprep.subr.mxu0 0.0
    %1227 = vmatpush1.msra.mxu0 0.0
    %1228 = vmatprep.subr.mxu0 0.0
    %1229 = vmatpush1.msra.mxu0 0.0
    %1230 = vmatprep.subr.mxu0 0.0
    %1231 = vmatpush1.msra.mxu0 0.0
    %1232 = vmatprep.subr.mxu0 0.0
    %1233 = vmatpush1.msra.mxu0 %v1200
    %1234 = vmatprep.subr.mxu0 0.0
    %1235 = vmatpush2.msra.mxu0 0.0
    %1236 = vmatprep.subr.mxu0 0.0
    %1237 = vmatpush2.msra.mxu0 0.0
    %1238 = vmatprep.subr.mxu0 0.0
    %1239 = vmatpush2.msra.mxu0 0.0
    %1240 = vmatprep.subr.mxu0 0.0
    %1241 = vmatpush2.msra.mxu0 0.0
    %1242 = vmatprep.subr.mxu0 0.0
    %1243 = vmatpush2.msra.mxu0 0.0
    %1244 = vmatprep.subr.mxu0 0.0
    %1245 = vmatpush2.msra.mxu0 0.0
    %1246 = vmatprep.subr.mxu0 0.0
    %1247 = vmatpush2.msra.mxu0 0.0
    %1248 = vmatprep.subr.mxu0 0.0
    %1249 = vmatpush2.msra.mxu0 0.0
    %1250 = vmatprep.subr.mxu0 0.0
    %1251 = vmatpush2.msra.mxu0 0.0
    %1252 = vmatprep.subr.mxu0 0.0
    %1253 = vmatpush2.msra.mxu0 0.0
    %1254 = vmatprep.subr.mxu0 0.0
    %1255 = vmatpush2.msra.mxu0 0.0
    %1256 = vmatprep.subr.mxu0 0.0
    %1257 = vmatpush2.msra.mxu0 0.0
    %1258 = vmatprep.subr.mxu0 0.0
    %1259 = vmatpush2.msra.mxu0 0.0
    %1260 = vmatprep.subr.mxu0 0.0
    %1261 = vmatpush2.msra.mxu0 0.0
    %1262 = vmatprep.subr.mxu0 0.0
    %1263 = vmatpush2.msra.mxu0 0.0
    %1264 = vmatprep.subr.mxu0 0.0
    %1265 = vmatpush2.msra.mxu0 0.0
    %1266 = vmatprep.mubr.f32.mxu0 0.0
    %1267 = vmatmul.mubr.f32.gmra.mxu0 %v1197
    %v1268 = vpop.f32.mrf.mxu0
    %v1269 = vadd.f32 0.0, %v1268
    %v1270 = vpop.f32.mrf.mxu0
    %1271 = vdwg.mxu0
    %v1272 = vadd.f32 %v1189, %v1269
    %v1273 = vld [vmem:[%s15] sm:$0x1]
    %v1275 = vlaneseq
    %v1276 = vshrl.u32 %v1275, 7
    %v1277 = vsub.s32 0, %v1276
    %v1278 = vrot.slane %v1273, %v1277
    %v1280 = vadd.f32 %v1272, %v1278
    %v1281 = vmax.f32 %v1280, 0.0
    %v1282 = vld [vmem:[%s16] sm:$0xff]
    %v1283 = vld [vmem:[%s16 + $0x8] sm:$0xff]
    %v1284 = vld [vmem:[%s16 + $0x10] sm:$0xff]
    %v1285 = vld [vmem:[%s16 + $0x18] sm:$0xff]
    %v1286 = vld [vmem:[%s17] sm:$0x1]
    %v1288 = vlaneseq
    %v1289 = vshrl.u32 %v1288, 7
    %v1290 = vsub.s32 0, %v1289
    %v1291 = vrot.slane %v1286, %v1290
    %v1294 = vsel %vm173, %v1281, 0
    %1296 = vmatprep.subr.mxu0 0.0
    %1297 = vmatpush1.msra.mxu0 0.0
    %1298 = vmatprep.subr.mxu0 0.0
    %1299 = vmatpush1.msra.mxu0 0.0
    %1300 = vmatprep.subr.mxu0 0.0
    %1301 = vmatpush1.msra.mxu0 0.0
    %1302 = vmatprep.subr.mxu0 0.0
    %1303 = vmatpush1.msra.mxu0 0.0
    %1304 = vmatprep.subr.mxu0 0.0
    %1305 = vmatpush1.msra.mxu0 0.0
    %1306 = vmatprep.subr.mxu0 0.0
    %1307 = vmatpush1.msra.mxu0 0.0
    %1308 = vmatprep.subr.mxu0 0.0
    %1309 = vmatpush1.msra.mxu0 0.0
    %1310 = vmatprep.subr.mxu0 0.0
    %1311 = vmatpush1.msra.mxu0 0.0
    %1312 = vmatprep.subr.mxu0 0.0
    %1313 = vmatpush1.msra.mxu0 0.0
    %1314 = vmatprep.subr.mxu0 0.0
    %1315 = vmatpush1.msra.mxu0 0.0
    %1316 = vmatprep.subr.mxu0 0.0
    %1317 = vmatpush1.msra.mxu0 0.0
    %1318 = vmatprep.subr.mxu0 0.0
    %1319 = vmatpush1.msra.mxu0 0.0
    %1320 = vmatprep.subr.mxu0 0.0
    %1321 = vmatpush1.msra.mxu0 %v1285
    %1322 = vmatprep.subr.mxu0 0.0
    %1323 = vmatpush1.msra.mxu0 %v1284
    %1324 = vmatprep.subr.mxu0 0.0
    %1325 = vmatpush1.msra.mxu0 %v1283
    %1326 = vmatprep.subr.mxu0 0.0
    %1327 = vmatpush1.msra.mxu0 %v1282
    %1328 = vmatprep.subr.mxu0 0.0
    %1329 = vmatpush2.msra.mxu0 0.0
    %1330 = vmatprep.subr.mxu0 0.0
    %1331 = vmatpush2.msra.mxu0 0.0
    %1332 = vmatprep.subr.mxu0 0.0
    %1333 = vmatpush2.msra.mxu0 0.0
    %1334 = vmatprep.subr.mxu0 0.0
    %1335 = vmatpush2.msra.mxu0 0.0
    %1336 = vmatprep.subr.mxu0 0.0
    %1337 = vmatpush2.msra.mxu0 0.0
    %1338 = vmatprep.subr.mxu0 0.0
    %1339 = vmatpush2.msra.mxu0 0.0
    %1340 = vmatprep.subr.mxu0 0.0
    %1341 = vmatpush2.msra.mxu0 0.0
    %1342 = vmatprep.subr.mxu0 0.0
    %1343 = vmatpush2.msra.mxu0 0.0
    %1344 = vmatprep.subr.mxu0 0.0
    %1345 = vmatpush2.msra.mxu0 0.0
    %1346 = vmatprep.subr.mxu0 0.0
    %1347 = vmatpush2.msra.mxu0 0.0
    %1348 = vmatprep.subr.mxu0 0.0
    %1349 = vmatpush2.msra.mxu0 0.0
    %1350 = vmatprep.subr.mxu0 0.0
    %1351 = vmatpush2.msra.mxu0 0.0
    %1352 = vmatprep.subr.mxu0 0.0
    %1353 = vmatpush2.msra.mxu0 0.0
    %1354 = vmatprep.subr.mxu0 0.0
    %1355 = vmatpush2.msra.mxu0 0.0
    %1356 = vmatprep.subr.mxu0 0.0
    %1357 = vmatpush2.msra.mxu0 0.0
    %1358 = vmatprep.subr.mxu0 0.0
    %1359 = vmatpush2.msra.mxu0 0.0
    %1360 = vmatprep.mubr.f32.mxu0 0.0
    %1361 = vmatmul.mubr.f32.gmra.mxu0 %v1294
    %v1362 = vpop.f32.mrf.mxu0
    %v1363 = vadd.f32 %v1291, %v1362
    %v1364 = vpop.f32.mrf.mxu0
    %1365 = vdwg.mxu0
    %v1366 = vmax.f32 %v1363, 0.0
    %v1367 = vld [vmem:[%s18] sm:$0xff]
    %v1368 = vld [vmem:[%s18 + $0x8] sm:$0xff]
    %v1369 = vld [vmem:[%s18 + $0x10] sm:$0xff]
    %v1370 = vld [vmem:[%s18 + $0x18] sm:$0xff]
    %v1371 = vld [vmem:[%s19] sm:$0x1]
    %v1373 = vlaneseq
    %v1374 = vshrl.u32 %v1373, 7
    %v1375 = vsub.s32 0, %v1374
    %v1376 = vrot.slane %v1371, %v1375
    %v1379 = vsel %vm173, %v1366, 0
    %1381 = vmatprep.subr.mxu0 0.0
    %1382 = vmatpush1.msra.mxu0 0.0
    %1383 = vmatprep.subr.mxu0 0.0
    %1384 = vmatpush1.msra.mxu0 0.0
    %1385 = vmatprep.subr.mxu0 0.0
    %1386 = vmatpush1.msra.mxu0 0.0
    %1387 = vmatprep.subr.mxu0 0.0
    %1388 = vmatpush1.msra.mxu0 0.0
    %1389 = vmatprep.subr.mxu0 0.0
    %1390 = vmatpush1.msra.mxu0 0.0
    %1391 = vmatprep.subr.mxu0 0.0
    %1392 = vmatpush1.msra.mxu0 0.0
    %1393 = vmatprep.subr.mxu0 0.0
    %1394 = vmatpush1.msra.mxu0 0.0
    %1395 = vmatprep.subr.mxu0 0.0
    %1396 = vmatpush1.msra.mxu0 0.0
    %1397 = vmatprep.subr.mxu0 0.0
    %1398 = vmatpush1.msra.mxu0 0.0
    %1399 = vmatprep.subr.mxu0 0.0
    %1400 = vmatpush1.msra.mxu0 0.0
    %1401 = vmatprep.subr.mxu0 0.0
    %1402 = vmatpush1.msra.mxu0 0.0
    %1403 = vmatprep.subr.mxu0 0.0
    %1404 = vmatpush1.msra.mxu0 0.0
    %1405 = vmatprep.subr.mxu0 0.0
    %1406 = vmatpush1.msra.mxu0 %v1370
    %1407 = vmatprep.subr.mxu0 0.0
    %1408 = vmatpush1.msra.mxu0 %v1369
    %1409 = vmatprep.subr.mxu0 0.0
    %1410 = vmatpush1.msra.mxu0 %v1368
    %1411 = vmatprep.subr.mxu0 0.0
    %1412 = vmatpush1.msra.mxu0 %v1367
    %1413 = vmatprep.subr.mxu0 0.0
    %1414 = vmatpush2.msra.mxu0 0.0
    %1415 = vmatprep.subr.mxu0 0.0
    %1416 = vmatpush2.msra.mxu0 0.0
    %1417 = vmatprep.subr.mxu0 0.0
    %1418 = vmatpush2.msra.mxu0 0.0
    %1419 = vmatprep.subr.mxu0 0.0
    %1420 = vmatpush2.msra.mxu0 0.0
    %1421 = vmatprep.subr.mxu0 0.0
    %1422 = vmatpush2.msra.mxu0 0.0
    %1423 = vmatprep.subr.mxu0 0.0
    %1424 = vmatpush2.msra.mxu0 0.0
    %1425 = vmatprep.subr.mxu0 0.0
    %1426 = vmatpush2.msra.mxu0 0.0
    %1427 = vmatprep.subr.mxu0 0.0
    %1428 = vmatpush2.msra.mxu0 0.0
    %1429 = vmatprep.subr.mxu0 0.0
    %1430 = vmatpush2.msra.mxu0 0.0
    %1431 = vmatprep.subr.mxu0 0.0
    %1432 = vmatpush2.msra.mxu0 0.0
    %1433 = vmatprep.subr.mxu0 0.0
    %1434 = vmatpush2.msra.mxu0 0.0
    %1435 = vmatprep.subr.mxu0 0.0
    %1436 = vmatpush2.msra.mxu0 0.0
    %1437 = vmatprep.subr.mxu0 0.0
    %1438 = vmatpush2.msra.mxu0 0.0
    %1439 = vmatprep.subr.mxu0 0.0
    %1440 = vmatpush2.msra.mxu0 0.0
    %1441 = vmatprep.subr.mxu0 0.0
    %1442 = vmatpush2.msra.mxu0 0.0
    %1443 = vmatprep.subr.mxu0 0.0
    %1444 = vmatpush2.msra.mxu0 0.0
    %1445 = vmatprep.mubr.f32.mxu0 0.0
    %1446 = vmatmul.mubr.f32.gmra.mxu0 %v1379
    %v1447 = vpop.f32.mrf.mxu0
    %v1448 = vadd.f32 %v1376, %v1447
    %v1449 = vpop.f32.mrf.mxu0
    %1450 = vdwg.mxu0
    %vm1451 = vcmask 25600
    %1452 = vst.msk [vmem:[#allocation2] sm:$0x3] %vm1451, %v1448
    // Predicated region
    $region82: #{tpu_custom_call.1} parent=1 // pred_check
      _
    $region83: #{tpu_custom_call.1} parent=1 // pred_check_branch
      %1454 = sbr.rel (0) target = $region85
    $region84: #{tpu_custom_call.1} parent=1 // pred_region
      %s1456 = ssub.s32 32, 32
      %1457 = vsyncadd [#allocation3], %s1456
      %s1459 = sshll.u32 [#allocation2], 4
      %s1460 = int_to_ptr.vmem [resolvable:$true] %s1459
      %1462 = dma.vmem_to_hbm [thread:$0]  %s1460, 32, %s20, [#allocation3]
    $region85: #{tpu_custom_call.1} parent=1 // pred_fallthru
      _
    // Predicated region
    $region86: #{tpu_custom_call.1} parent=1 // pred_check
      _
    $region87: #{tpu_custom_call.1} parent=1 // pred_check_branch
      %1464 = sbr.rel (0) target = $region89
    $region88: #{tpu_custom_call.1} parent=1 // pred_region
      %1465 = dma.done [#allocation3], 32
    $region89: #{tpu_custom_call.1} parent=1 // pred_fallthru
      _
    %1466 = vsyncpa [#allocation3], 1

</llo_original>
